<compile_context>
chip_gen: v5e
topology: v5e:2x2
jax: 0.10.0
libtpu: 0.0.40
codegen_flags: <defaults>
</compile_context>

<pallas_src>
import numpy as np

import jax
import jax.numpy as jnp
from jax.experimental import pallas as pl
from jax.experimental.pallas import tpu as pltpu


_REL_NAMES = ("DDI", "DPI", "PPI")
_EDGE_NODE_TYPES = {
    "DDI": ("drug", "drug"),
    "DPI": ("drug", "protein"),
    "PPI": ("protein", "protein"),
}
# PPI faithfully reuses the DPI rel vector (original forward calls edge_func_dpi
# for the ('protein', 'PPI', 'protein') edge type).
_REL_VECTOR_ID = {"DDI": 0, "DPI": 1, "PPI": 1}


def _round_up(x, m):
    return ((x + m - 1) // m) * m


def _split_hi_lo_bf16(x_f32):
    """Exact-ish bf16 hi/lo split: hi + lo == x to <= ~2^-17 relative error."""
    hi = x_f32.astype(jnp.bfloat16)
    lo = (x_f32 - hi.astype(jnp.float32)).astype(jnp.bfloat16)
    return hi, lo


def _fused_edge_score_kernel(rel_id_ref,   # scalar-prefetch (SMEM), used only in index_maps
                             idx_ref,      # (1, 2, TE) int32: row 0 = src, row 1 = dst
                             nodes_ref,    # (2, D, N_pad) bf16: [0]=hi, [1]=lo, VMEM-resident
                             rel_ref,      # (1, D, 1) f32: rel vector for this tile's relation
                             o_ref):       # (1, 1, TE) f32: lane-dense scores
    del rel_id_ref
    n_pad = nodes_ref.shape[-1]
    te = idx_ref.shape[-1]

    idx = idx_ref[0]                                                 # (2, TE) int32
    node_iota = jax.lax.broadcasted_iota(jnp.int32, (n_pad, te), 0)  # (N_pad, TE)
    nodes_hi = nodes_ref[0]                                          # (D, N_pad) bf16
    nodes_lo = nodes_ref[1]                                          # (D, N_pad) bf16

    def gather(idx_row):
        # One-hot gather on the MXU in bf16 (0/1 weights exact in bf16); f32 accumulate.
        onehot = jnp.where(node_iota == idx_row, 1.0, 0.0).astype(jnp.bfloat16)
        return (jnp.dot(nodes_hi, onehot, preferred_element_type=jnp.float32)
                + jnp.dot(nodes_lo, onehot, preferred_element_type=jnp.float32))

    # src gather is fully consumed before the dst one-hot is built -> only one
    # (N_pad, TE) one-hot live at a time.
    head_t = gather(idx[0:1, :])                                     # (D, TE) f32
    tail_t = gather(idx[1:2, :])                                     # (D, TE) f32

    rel_col = rel_ref[0]                                             # (D, 1) f32
    # rel multiply + feature (sublane-axis) reduction in f32 -> lane-dense (1, TE) row.
    o_ref[0] = jnp.sum(head_t * rel_col * tail_t, axis=0, keepdims=True)


def init_score_predictor_params(feature_size, dtype=jnp.float32):
    """Matches ScorePredictor.__init__: rels['DDI'/'DPI'/'PPI'] are ones of shape (D,)."""
    return {name: jnp.ones((feature_size,), dtype) for name in _REL_NAMES}


def score_predictor_forward(rels, x, edges, *, edge_tile=512, vmem_limit_bytes=None):
    """Pallas-backed equivalent of ScorePredictor.forward.

    rels:  dict rel name -> (D,) vectors.
    x:     dict {'drug': (Nd, D), 'protein': (Np, D)} node features.
    edges: dict rel name -> (src_idx, dst_idx) int arrays; node types are
           DDI: drug->drug, DPI: drug->protein, PPI: protein->protein.
    Returns dict rel name -> (E_rel,) f32 scores.

    Not jitted here so the resident-table fallback can catch compile-time errors; the
    surrounding glue is tiny and pallas_call itself is compiled.  Callers may jit.
    """
    x_drug = x["drug"].astype(jnp.float32)
    x_prot = x["protein"].astype(jnp.float32)
    n_drug, d = x_drug.shape
    n_prot, d2 = x_prot.shape
    assert d == d2, "drug/protein feature dims must match"
    assert d % 128 == 0, "feature dim must be a multiple of 128"
    assert edge_tile % 128 == 0, "edge_tile must be a multiple of 128 (lane-dense output)"

    # Combined node table, padded to 128 nodes, transposed to (D, N_pad), split into an
    # exact bf16 hi/lo pair for the MXU gather (see module docstring).
    n_total = n_drug + n_prot
    n_pad = _round_up(n_total, 128)
    nodes = jnp.concatenate([x_drug, x_prot], axis=0)
    nodes = jnp.pad(nodes, ((0, n_pad - n_total), (0, 0)))
    nodes_hi, nodes_lo = _split_hi_lo_bf16(nodes.T)                    # each (D, N_pad) bf16
    nodes_hilo = jnp.stack([nodes_hi, nodes_lo], axis=0)               # (2, D, N_pad) bf16

    # rel table shaped (3, D, 1): per-tile block (1, D, 1) has its last two dims equal to
    # the full array dims (clean (8,128) blocking); column layout broadcasts over edges.
    rel_table = jnp.stack(
        [rels["DDI"], rels["DPI"], rels["PPI"]], axis=0
    ).astype(jnp.float32).reshape(3, d, 1)

    node_offset = {"drug": 0, "protein": n_drug}

    idx_rows, rel_id_chunks, tiles_per_rel, edges_per_rel = [], [], [], []
    for name in _REL_NAMES:
        src, dst = edges[name]
        s_type, d_type = _EDGE_NODE_TYPES[name]
        src = src.astype(jnp.int32) + node_offset[s_type]
        dst = dst.astype(jnp.int32) + node_offset[d_type]
        n_e = src.shape[0]
        n_tiles = max(1, pl.cdiv(n_e, edge_tile))
        pad = n_tiles * edge_tile - n_e
        # Padded edges point at node 0 (valid); their scores are sliced off below.
        src = jnp.pad(src, (0, pad)).reshape(n_tiles, 1, edge_tile)
        dst = jnp.pad(dst, (0, pad)).reshape(n_tiles, 1, edge_tile)
        idx_rows.append(jnp.concatenate([src, dst], axis=1))           # (n_tiles, 2, TE)
        rel_id_chunks.append(np.full((n_tiles,), _REL_VECTOR_ID[name], np.int32))
        tiles_per_rel.append(n_tiles)
        edges_per_rel.append(n_e)

    idx_all = jnp.concatenate(idx_rows, axis=0)                        # (T, 2, TE) packed src/dst
    rel_ids = jnp.asarray(np.concatenate(rel_id_chunks))               # (T,) int32
    num_tiles = idx_all.shape[0]

    compiler_params = pltpu.CompilerParams(
        dimension_semantics=("parallel",),        # independent tiles; megacore-shardable on v7x
        vmem_limit_bytes=vmem_limit_bytes,        # None = compiler default; raise for big tiles
    )

    def run(resident_vmem):
        if resident_vmem:
            # Whole-array VMEM operand: copied in once, single-buffered (no 2x pipeline
            # buffer on the biggest VMEM consumer).
            nodes_spec = pl.BlockSpec(memory_space=pltpu.MemorySpace.VMEM)
        else:
            # Fallback: constant-index pipelined block (resident, but double-buffered).
            nodes_spec = pl.BlockSpec((2, d, n_pad), lambda i, rid: (0, 0, 0))
        return pl.pallas_call(
            _fused_edge_score_kernel,
            out_shape=jax.ShapeDtypeStruct((num_tiles, 1, edge_tile), jnp.float32),
            grid_spec=pltpu.PrefetchScalarGridSpec(
                num_scalar_prefetch=1,             # per-tile relation id (SMEM)
                grid=(num_tiles,),
                in_specs=[
                    pl.BlockSpec((1, 2, edge_tile), lambda i, rid: (i, 0, 0)),  # packed src/dst
                    nodes_spec,                                                 # node table
                    pl.BlockSpec((1, d, 1), lambda i, rid: (rid[i], 0, 0)),     # rel vector
                ],
                out_specs=pl.BlockSpec((1, 1, edge_tile), lambda i, rid: (i, 0, 0)),
            ),
            compiler_params=compiler_params,
        )(rel_ids, idx_all, nodes_hilo, rel_table)

    try:
        out = run(resident_vmem=True)
    except Exception:  # noqa: BLE001 - untiled-VMEM operand unsupported -> pipelined fallback
        out = run(resident_vmem=False)

    # Split back per relation and drop the padded scores.
    flat = out.reshape(-1)
    scores = {}
    start = 0
    for name, n_tiles, n_e in zip(_REL_NAMES, tiles_per_rel, edges_per_rel):
        seg = flat[start * edge_tile:(start + n_tiles) * edge_tile]
        scores[name] = seg[:n_e]
        start += n_tiles
    return scores


if __name__ == "__main__":
    # Small shapes consistent with the module (feature dim scaled down from 2048).
    D = 256          # feature size (module hardcodes 2048; scaled down, 128-aligned)
    N_DRUG = 32
    N_PROT = 48
    E = 300          # edges per relation (NOT a tile multiple -> exercises padding)
    EDGE_TILE = 128  # lane-dense tile; keeps grid length >= 2 for v7x megacore

    key = jax.random.PRNGKey(0)
    k1, k2, k3, k4, k5, k6, k7, k8 = jax.random.split(key, 8)

    x = {
        "drug": jax.random.normal(k1, (N_DRUG, D), jnp.float32),
        "protein": jax.random.normal(k2, (N_PROT, D), jnp.float32),
    }
    edges = {
        "DDI": (jax.random.randint(k3, (E,), 0, N_DRUG),
                jax.random.randint(k4, (E,), 0, N_DRUG)),
        "DPI": (jax.random.randint(k5, (E,), 0, N_DRUG),
                jax.random.randint(k6, (E,), 0, N_PROT)),
        "PPI": (jax.random.randint(k7, (E,), 0, N_PROT),
                jax.random.randint(k8, (E,), 0, N_PROT)),
    }
    rels = init_score_predictor_params(D)

    out = score_predictor_forward(rels, x, edges, edge_tile=EDGE_TILE)
    out = jax.block_until_ready(out)

    # Reference check in plain f32 JAX.  Tolerance: the bf16 hi/lo node-table split keeps
    # per-feature relative error <= ~2^-17, giving per-score error ~1e-4 for D=256 unit
    # normals; 2e-3 leaves a wide margin while still catching real bugs.
    def ref(head, tail, rel):
        return jnp.sum(head * rel[None, :] * tail, axis=-1)

    checks = {
        "DDI": ("drug", "drug", "DDI"),
        "DPI": ("drug", "protein", "DPI"),
        "PPI": ("protein", "protein", "DPI"),  # PPI uses the DPI rel vector (faithful to forward)
    }
    for name, (h_type, t_type, r_name) in checks.items():
        src, dst = edges[name]
        expected = ref(jnp.take(x[h_type], src, axis=0),
                       jnp.take(x[t_type], dst, axis=0),
                       rels[r_name])
        assert out[name].shape == (E,), (name, out[name].shape)
        err = float(jnp.max(jnp.abs(out[name] - expected)))
        assert jnp.allclose(out[name], expected, atol=2e-3, rtol=2e-3), (name, err)

    print("KERNEL_OK")
</pallas_src>

<mosaic_0001>
module attributes {stable_mosaic.version = 11 : i64} {
  func.func @_fused_edge_score_kernel(%arg0: i32, %arg1: memref<9xi32, #tpu.memory_space<smem>>, %arg2: memref<1x2x128xi32, #tpu.memory_space<vmem>>, %arg3: memref<2x256x128xbf16, #tpu.memory_space<vmem>>, %arg4: memref<1x256x1xf32, #tpu.memory_space<vmem>>, %arg5: memref<1x1x128xf32, #tpu.memory_space<vmem>>) attributes {dimension_semantics = [#tpu.dimension_semantics<parallel>], iteration_bounds = array<i64: 9>, scalar_prefetch = 1 : i64, scratch_operands = 0 : i64, tpu.core_type = #tpu.core_type<tc>, window_params = [{transform_indices = @transform_0, window_bounds = array<i64: 1, 2, 128>}, {pipeline_mode = #tpu.pipeline_mode<synchronous>, transform_indices = @transform_1, window_bounds = array<i64: 2, 256, 128>}, {transform_indices = @transform_2, window_bounds = array<i64: 1, 256, 1>}, {transform_indices = @transform_3, window_bounds = array<i64: 1, 1, 128>}]} {
    %c0 = arith.constant 0 : index
    %c0_0 = arith.constant 0 : index
    %c0_1 = arith.constant 0 : index
    %0 = vector.load %arg2[%c0, %c0_0, %c0_1] : memref<1x2x128xi32, #tpu.memory_space<vmem>>, vector<1x2x128xi32>
    %1 = vector.shape_cast %0 : vector<1x2x128xi32> to vector<2x128xi32>
    %2 = tpu.iota {dimensions = array<i32: 0>} : vector<128x128xi32>
    %c0_2 = arith.constant 0 : index
    %c0_3 = arith.constant 0 : index
    %c0_4 = arith.constant 0 : index
    %3 = vector.load %arg3[%c0_2, %c0_3, %c0_4] : memref<2x256x128xbf16, #tpu.memory_space<vmem>>, vector<1x256x128xbf16>
    %4 = vector.shape_cast %3 : vector<1x256x128xbf16> to vector<256x128xbf16>
    %c1 = arith.constant 1 : index
    %c0_5 = arith.constant 0 : index
    %c0_6 = arith.constant 0 : index
    %5 = vector.load %arg3[%c1, %c0_5, %c0_6] : memref<2x256x128xbf16, #tpu.memory_space<vmem>>, vector<1x256x128xbf16>
    %6 = vector.shape_cast %5 : vector<1x256x128xbf16> to vector<256x128xbf16>
    %7 = vector.extract_strided_slice %1 {offsets = [0, 0], sizes = [1, 128], strides = [1, 1]} : vector<2x128xi32> to vector<1x128xi32>
    %8 = vector.broadcast %7 : vector<1x128xi32> to vector<128x128xi32>
    %9 = arith.cmpi eq, %2, %8 : vector<128x128xi32>
    %cst = arith.constant 1.000000e+00 : f32
    %cst_7 = arith.constant 0.000000e+00 : f32
    %10 = vector.broadcast %cst : f32 to vector<128x128xf32>
    %11 = vector.broadcast %cst_7 : f32 to vector<128x128xf32>
    %12 = arith.select %9, %10, %11 : vector<128x128xi1>, vector<128x128xf32>
    %13 = arith.truncf %12 : vector<128x128xf32> to vector<128x128xbf16>
    %cst_8 = arith.constant dense<0.000000e+00> : vector<256x128xf32>
    %14 = tpu.matmul %4, %13, %cst_8 {dimension_numbers = #tpu.dot_dimension_numbers<[1], [0], [0], [1], [0, 0, 1, 1], [], []>} : vector<256x128xbf16>, vector<128x128xbf16>, vector<256x128xf32> -> vector<256x128xf32>
    %cst_9 = arith.constant dense<0.000000e+00> : vector<256x128xf32>
    %15 = tpu.matmul %6, %13, %cst_9 {dimension_numbers = #tpu.dot_dimension_numbers<[1], [0], [0], [1], [0, 0, 1, 1], [], []>} : vector<256x128xbf16>, vector<128x128xbf16>, vector<256x128xf32> -> vector<256x128xf32>
    %16 = arith.addf %14, %15 : vector<256x128xf32>
    %17 = vector.extract_strided_slice %1 {offsets = [1, 0], sizes = [1, 128], strides = [1, 1]} : vector<2x128xi32> to vector<1x128xi32>
    %18 = vector.broadcast %17 : vector<1x128xi32> to vector<128x128xi32>
    %19 = arith.cmpi eq, %2, %18 : vector<128x128xi32>
    %cst_10 = arith.constant 1.000000e+00 : f32
    %cst_11 = arith.constant 0.000000e+00 : f32
    %20 = vector.broadcast %cst_10 : f32 to vector<128x128xf32>
    %21 = vector.broadcast %cst_11 : f32 to vector<128x128xf32>
    %22 = arith.select %19, %20, %21 : vector<128x128xi1>, vector<128x128xf32>
    %23 = arith.truncf %22 : vector<128x128xf32> to vector<128x128xbf16>
    %cst_12 = arith.constant dense<0.000000e+00> : vector<256x128xf32>
    %24 = tpu.matmul %4, %23, %cst_12 {dimension_numbers = #tpu.dot_dimension_numbers<[1], [0], [0], [1], [0, 0, 1, 1], [], []>} : vector<256x128xbf16>, vector<128x128xbf16>, vector<256x128xf32> -> vector<256x128xf32>
    %cst_13 = arith.constant dense<0.000000e+00> : vector<256x128xf32>
    %25 = tpu.matmul %6, %23, %cst_13 {dimension_numbers = #tpu.dot_dimension_numbers<[1], [0], [0], [1], [0, 0, 1, 1], [], []>} : vector<256x128xbf16>, vector<128x128xbf16>, vector<256x128xf32> -> vector<256x128xf32>
    %26 = arith.addf %24, %25 : vector<256x128xf32>
    %c0_14 = arith.constant 0 : index
    %c0_15 = arith.constant 0 : index
    %c0_16 = arith.constant 0 : index
    %27 = vector.load %arg4[%c0_14, %c0_15, %c0_16] : memref<1x256x1xf32, #tpu.memory_space<vmem>>, vector<1x256x1xf32>
    %28 = vector.shape_cast %27 : vector<1x256x1xf32> to vector<256x1xf32>
    %29 = vector.broadcast %28 : vector<256x1xf32> to vector<256x128xf32>
    %30 = arith.mulf %16, %29 : vector<256x128xf32>
    %31 = arith.mulf %30, %26 : vector<256x128xf32>
    %cst_17 = arith.constant dense<0.000000e+00> : vector<128xf32>
    %32 = vector.multi_reduction <add>, %31, %cst_17 [0] : vector<256x128xf32> to vector<128xf32>
    %33 = vector.shape_cast %32 : vector<128xf32> to vector<1x128xf32>
    %c0_18 = arith.constant 0 : index
    %c0_19 = arith.constant 0 : index
    %c0_20 = arith.constant 0 : index
    %34 = vector.load %arg5[%c0_18, %c0_19, %c0_20] : memref<1x1x128xf32, #tpu.memory_space<vmem>>, vector<1x1x128xf32>
    %35 = vector.shape_cast %34 : vector<1x1x128xf32> to vector<1x128xf32>
    %36 = vector.shape_cast %33 : vector<1x128xf32> to vector<1x1x128xf32>
    tpu.vector_store %arg5[%c0_18, %c0_19, %c0_20], %36 {strides = array<i32>} : memref<1x1x128xf32, #tpu.memory_space<vmem>>, vector<1x1x128xf32>,
    return
  }
  func.func @transform_0(%arg0: i32, %arg1: memref<9xi32, #tpu.memory_space<smem>>) -> (i32, i32, i32) {
    %c0_i32 = arith.constant 0 : i32
    %c0_i32_0 = arith.constant 0 : i32
    %c0_i32_1 = arith.constant 0 : i32
    return %arg0, %c0_i32, %c0_i32_0 : i32, i32, i32
  }
  func.func @transform_1(%arg0: i32, %arg1: memref<9xi32, #tpu.memory_space<smem>>) -> (i32, i32, i32) {
    %c0_i32 = arith.constant 0 : i32
    %c0_i32_0 = arith.constant 0 : i32
    %c0_i32_1 = arith.constant 0 : i32
    %c0_i32_2 = arith.constant 0 : i32
    return %c0_i32, %c0_i32_0, %c0_i32_1 : i32, i32, i32
  }
  func.func @transform_2(%arg0: i32, %arg1: memref<9xi32, #tpu.memory_space<smem>>) -> (i32, i32, i32) {
    %0 = arith.index_cast %arg0 : i32 to index
    %1 = memref.load %arg1[%0] : memref<9xi32, #tpu.memory_space<smem>>
    %c0_i32 = arith.constant 0 : i32
    %c0_i32_0 = arith.constant 0 : i32
    %c0_i32_1 = arith.constant 0 : i32
    return %1, %c0_i32, %c0_i32_0 : i32, i32, i32
  }
  func.func @transform_3(%arg0: i32, %arg1: memref<9xi32, #tpu.memory_space<smem>>) -> (i32, i32, i32) {
    %c0_i32 = arith.constant 0 : i32
    %c0_i32_0 = arith.constant 0 : i32
    %c0_i32_1 = arith.constant 0 : i32
    return %arg0, %c0_i32, %c0_i32_0 : i32, i32, i32
  }
}

module attributes {stable_mosaic.version = 11 : i64} {
  func.func @_fused_edge_score_kernel(%arg0: i32, %arg1: memref<9xi32, #tpu.memory_space<smem>>, %arg2: memref<1x2x128xi32, #tpu.memory_space<vmem>>, %arg3: memref<2x256x128xbf16, #tpu.memory_space<vmem>>, %arg4: memref<1x256x1xf32, #tpu.memory_space<vmem>>, %arg5: memref<1x1x128xf32, #tpu.memory_space<vmem>>) attributes {dimension_semantics = [#tpu.dimension_semantics<parallel>], iteration_bounds = array<i64: 9>, scalar_prefetch = 1 : i64, scratch_operands = 0 : i64, tpu.core_type = #tpu.core_type<tc>, window_params = [{transform_indices = @transform_0, window_bounds = array<i64: 1, 2, 128>}, {pipeline_mode = #tpu.pipeline_mode<synchronous>, transform_indices = @transform_1, window_bounds = array<i64: 2, 256, 128>}, {transform_indices = @transform_2, window_bounds = array<i64: 1, 256, 1>}, {transform_indices = @transform_3, window_bounds = array<i64: 1, 1, 128>}]} {
    %c0 = arith.constant 0 : index
    %c0_0 = arith.constant 0 : index
    %c0_1 = arith.constant 0 : index
    %0 = vector.load %arg2[%c0, %c0_0, %c0_1] : memref<1x2x128xi32, #tpu.memory_space<vmem>>, vector<1x2x128xi32>
    %1 = vector.shape_cast %0 : vector<1x2x128xi32> to vector<2x128xi32>
    %2 = tpu.iota {dimensions = array<i32: 0>} : vector<128x128xi32>
    %c0_2 = arith.constant 0 : index
    %c0_3 = arith.constant 0 : index
    %c0_4 = arith.constant 0 : index
    %3 = vector.load %arg3[%c0_2, %c0_3, %c0_4] : memref<2x256x128xbf16, #tpu.memory_space<vmem>>, vector<1x256x128xbf16>
    %4 = vector.shape_cast %3 : vector<1x256x128xbf16> to vector<256x128xbf16>
    %c1 = arith.constant 1 : index
    %c0_5 = arith.constant 0 : index
    %c0_6 = arith.constant 0 : index
    %5 = vector.load %arg3[%c1, %c0_5, %c0_6] : memref<2x256x128xbf16, #tpu.memory_space<vmem>>, vector<1x256x128xbf16>
    %6 = vector.shape_cast %5 : vector<1x256x128xbf16> to vector<256x128xbf16>
    %7 = vector.extract_strided_slice %1 {offsets = [0, 0], sizes = [1, 128], strides = [1, 1]} : vector<2x128xi32> to vector<1x128xi32>
    %8 = vector.broadcast %7 : vector<1x128xi32> to vector<128x128xi32>
    %9 = arith.cmpi eq, %2, %8 : vector<128x128xi32>
    %cst = arith.constant 1.000000e+00 : f32
    %cst_7 = arith.constant 0.000000e+00 : f32
    %10 = vector.broadcast %cst : f32 to vector<128x128xf32>
    %11 = vector.broadcast %cst_7 : f32 to vector<128x128xf32>
    %12 = arith.select %9, %10, %11 : vector<128x128xi1>, vector<128x128xf32>
    %13 = arith.truncf %12 : vector<128x128xf32> to vector<128x128xbf16>
    %cst_8 = arith.constant dense<0.000000e+00> : vector<256x128xf32>
    %14 = tpu.matmul %4, %13, %cst_8 {dimension_numbers = #tpu.dot_dimension_numbers<[1], [0], [0], [1], [0, 0, 1, 1], [], []>} : vector<256x128xbf16>, vector<128x128xbf16>, vector<256x128xf32> -> vector<256x128xf32>
    %cst_9 = arith.constant dense<0.000000e+00> : vector<256x128xf32>
    %15 = tpu.matmul %6, %13, %cst_9 {dimension_numbers = #tpu.dot_dimension_numbers<[1], [0], [0], [1], [0, 0, 1, 1], [], []>} : vector<256x128xbf16>, vector<128x128xbf16>, vector<256x128xf32> -> vector<256x128xf32>
    %16 = arith.addf %14, %15 : vector<256x128xf32>
    %17 = vector.extract_strided_slice %1 {offsets = [1, 0], sizes = [1, 128], strides = [1, 1]} : vector<2x128xi32> to vector<1x128xi32>
    %18 = vector.broadcast %17 : vector<1x128xi32> to vector<128x128xi32>
    %19 = arith.cmpi eq, %2, %18 : vector<128x128xi32>
    %cst_10 = arith.constant 1.000000e+00 : f32
    %cst_11 = arith.constant 0.000000e+00 : f32
    %20 = vector.broadcast %cst_10 : f32 to vector<128x128xf32>
    %21 = vector.broadcast %cst_11 : f32 to vector<128x128xf32>
    %22 = arith.select %19, %20, %21 : vector<128x128xi1>, vector<128x128xf32>
    %23 = arith.truncf %22 : vector<128x128xf32> to vector<128x128xbf16>
    %cst_12 = arith.constant dense<0.000000e+00> : vector<256x128xf32>
    %24 = tpu.matmul %4, %23, %cst_12 {dimension_numbers = #tpu.dot_dimension_numbers<[1], [0], [0], [1], [0, 0, 1, 1], [], []>} : vector<256x128xbf16>, vector<128x128xbf16>, vector<256x128xf32> -> vector<256x128xf32>
    %cst_13 = arith.constant dense<0.000000e+00> : vector<256x128xf32>
    %25 = tpu.matmul %6, %23, %cst_13 {dimension_numbers = #tpu.dot_dimension_numbers<[1], [0], [0], [1], [0, 0, 1, 1], [], []>} : vector<256x128xbf16>, vector<128x128xbf16>, vector<256x128xf32> -> vector<256x128xf32>
    %26 = arith.addf %24, %25 : vector<256x128xf32>
    %c0_14 = arith.constant 0 : index
    %c0_15 = arith.constant 0 : index
    %c0_16 = arith.constant 0 : index
    %27 = vector.load %arg4[%c0_14, %c0_15, %c0_16] : memref<1x256x1xf32, #tpu.memory_space<vmem>>, vector<1x256x1xf32>
    %28 = vector.shape_cast %27 : vector<1x256x1xf32> to vector<256x1xf32>
    %29 = vector.broadcast %28 : vector<256x1xf32> to vector<256x128xf32>
    %30 = arith.mulf %16, %29 : vector<256x128xf32>
    %31 = arith.mulf %30, %26 : vector<256x128xf32>
    %cst_17 = arith.constant dense<0.000000e+00> : vector<128xf32>
    %32 = vector.multi_reduction <add>, %31, %cst_17 [0] : vector<256x128xf32> to vector<128xf32>
    %33 = vector.shape_cast %32 : vector<128xf32> to vector<1x128xf32>
    %c0_18 = arith.constant 0 : index
    %c0_19 = arith.constant 0 : index
    %c0_20 = arith.constant 0 : index
    %34 = vector.load %arg5[%c0_18, %c0_19, %c0_20] : memref<1x1x128xf32, #tpu.memory_space<vmem>>, vector<1x1x128xf32>
    %35 = vector.shape_cast %34 : vector<1x1x128xf32> to vector<1x128xf32>
    %36 = vector.shape_cast %33 : vector<1x128xf32> to vector<1x1x128xf32>
    tpu.vector_store %arg5[%c0_18, %c0_19, %c0_20], %36 {strides = array<i32>} : memref<1x1x128xf32, #tpu.memory_space<vmem>>, vector<1x1x128xf32>,
    return
  }
  func.func @transform_0(%arg0: i32, %arg1: memref<9xi32, #tpu.memory_space<smem>>) -> (i32, i32, i32) {
    %c0_i32 = arith.constant 0 : i32
    %c0_i32_0 = arith.constant 0 : i32
    %c0_i32_1 = arith.constant 0 : i32
    return %arg0, %c0_i32, %c0_i32_0 : i32, i32, i32
  }
  func.func @transform_1(%arg0: i32, %arg1: memref<9xi32, #tpu.memory_space<smem>>) -> (i32, i32, i32) {
    %c0_i32 = arith.constant 0 : i32
    %c0_i32_0 = arith.constant 0 : i32
    %c0_i32_1 = arith.constant 0 : i32
    %c0_i32_2 = arith.constant 0 : i32
    return %c0_i32, %c0_i32_0, %c0_i32_1 : i32, i32, i32
  }
  func.func @transform_2(%arg0: i32, %arg1: memref<9xi32, #tpu.memory_space<smem>>) -> (i32, i32, i32) {
    %0 = arith.index_cast %arg0 : i32 to index
    %1 = memref.load %arg1[%0] : memref<9xi32, #tpu.memory_space<smem>>
    %c0_i32 = arith.constant 0 : i32
    %c0_i32_0 = arith.constant 0 : i32
    %c0_i32_1 = arith.constant 0 : i32
    return %1, %c0_i32, %c0_i32_0 : i32, i32, i32
  }
  func.func @transform_3(%arg0: i32, %arg1: memref<9xi32, #tpu.memory_space<smem>>) -> (i32, i32, i32) {
    %c0_i32 = arith.constant 0 : i32
    %c0_i32_0 = arith.constant 0 : i32
    %c0_i32_1 = arith.constant 0 : i32
    return %arg0, %c0_i32, %c0_i32_0 : i32, i32, i32
  }
}

</mosaic_0001>

<llo_original>
// kernel: tpu_custom_call.1
$region0: #{tpu_custom_call.1}
  #allocation0 [shape = 'u32[]', space=smem, size = 0x4, offset = 0x4, fixed_abs, tag = 'smem constant byte address 0x4 - core index']
  #allocation1 [shape = 'u32[72,128]{1,0:T(1,128)}', space=vmem, size = 0x9000, scoped, tag = 'internal scratch']
  #allocation2 [shape = 's32[1]{0}', space=sflag, size = 0x4, scoped, tag = 'scoped memory for tpu_custom_call.1']
  #allocation3 [shape = 'u8[512]{0}', space=smem, size = 0x200, scoped, tag = 'prefetched SMEM operand 0']
  %s0 = inlined_call_operand.vmem [shape: s32[9], index: 0, kind: input, shape index: {}]
  %s1 = inlined_call_operand.vmem [shape: s32[9,2,128], index: 1, kind: input, shape index: {}]
  %s2 = inlined_call_operand.vmem [shape: bf16[2,256,128], index: 2, kind: input, shape index: {}]
  %s3 = inlined_call_operand.vmem [shape: f32[3,256,1], index: 3, kind: input, shape index: {}]
  %s4 = inlined_call_operand.hbm [shape: f32[9,1,128], index: 4, kind: output, shape index: {}]
  %s5 = sld [smem:[#allocation0]]
  $region45: #{tpu_custom_call.1} parent=0
    _
  %s7 = ssub.s32 1, %s5
  %s8 = scalar_select 0, %s7, %s5
  %s10 = sshll.u32 %s0, 4
  %s11 = int_to_ptr.vmem [resolvable:$true] %s10
  %13 = dma.vmem_to_smem %s11, 16, [#allocation3], [#allocation2]
  %15 = dma.done [#allocation2], 16
  %16 = sfence
  $region1: #{tpu_custom_call.1} parent=0
    #allocation4 [shape = 'u8[1024]{0}', space=vmem, size = 0x400, scoped, tag = 'output window, operand 0']
    #allocation5 [shape = 's32[2]{0}', space=sflag, size = 0x8, scoped, tag = 'scoped memory for tpu_custom_call.1']
    %17 = vsyncpa [#allocation5], 0
    %s18 = scalar_lea.sflag [#allocation5], 1
    %19 = vsyncpa %s18, 0
    loop: start=0, step=1, limit=11
    $region2: #{tpu_custom_call.1} parent=1 // loop_pre_header
      _
    $region3: #{tpu_custom_call.1} parent=1 // loop_header
      %s21 = sphi 0, %s25
      %p22 = scmp.ge.s32.totalorder %s21, 11
      %s31 = sphi 0, %s33
      %s34 = sphi 0, %s31
      %s35 = sphi 0, %s34
      %s51 = sphi 0, %s35
      %s55 = sphi 0, %s55
      %s57 = sphi 0, %s55
      %s58 = sphi 0, %s57
      %s72 = sphi 0, %s58
      %s80 = sphi 0, %s82
      %s83 = sphi 0, %s80
      %s84 = sphi 0, %s83
      %s100 = sphi 0, %s84
      %s106 = sphi 0, %s108
      %s109 = sphi 0, %s106
      %s110 = sphi 0, %s109
      %s126 = sphi 0, %s110
    $region4: #{tpu_custom_call.1} parent=1 // loop_header_branch
      %24 = sbr.rel (%p22) target = $region8
    $region5: #{tpu_custom_call.1} parent=1 // loop_body
      %s26 = ssub.s32 %s21, 1
      %s27 = ssub.s32 %s21, 2
      %s28 = sadd.s32 %s21, 1
      %s29 = ssub.s32 %s21, %s28
      %p30 = scmp.eq.s32.totalorder %s29, 0
      %s32 = sadd.s32 %s31, 1
      %s33 = scalar_select %p30, %s31, %s32
      %p36 = pneg %p30
      %p37 = scmp.eq.s32.totalorder %s21, 8
      %p38 = por %p36, %p37
      %p39 = scmp.ne.s32.totalorder %s31, %s34
      %p40 = scmp.eq.s32.totalorder %s21, 0
      %p41 = por %p39, %p40
      %p42 = scmp.ne.s32.totalorder %s31, %s34
      %p43 = scmp.eq.s32.totalorder %s26, 8
      %p44 = por %p42, %p43
      %p45 = scmp.ne.s32.totalorder %s34, %s35
      %p46 = scmp.eq.s32.totalorder %s26, 0
      %p47 = por %p45, %p46
      %p48 = scmp.ne.s32.totalorder %s34, %s35
      %p49 = scmp.eq.s32.totalorder %s27, 8
      %p50 = por %p48, %p49
      %p52 = scmp.ne.s32.totalorder %s35, %s51
      %p53 = scmp.eq.s32.totalorder %s27, 0
      %p54 = por %p52, %p53
      %s56 = sadd.s32 %s55, 1
      %p59 = scmp.eq.s32.totalorder %s21, 8
      %p60 = scmp.ne.s32.totalorder %s55, %s57
      %p61 = scmp.eq.s32.totalorder %s21, 0
      %p62 = por %p60, %p61
      %p63 = scmp.ne.s32.totalorder %s55, %s57
      %p64 = scmp.eq.s32.totalorder %s26, 8
      %p65 = por %p63, %p64
      %p66 = scmp.ne.s32.totalorder %s57, %s58
      %p67 = scmp.eq.s32.totalorder %s26, 0
      %p68 = por %p66, %p67
      %p69 = scmp.ne.s32.totalorder %s57, %s58
      %p70 = scmp.eq.s32.totalorder %s27, 8
      %p71 = por %p69, %p70
      %p73 = scmp.ne.s32.totalorder %s58, %s72
      %p74 = scmp.eq.s32.totalorder %s27, 0
      %p75 = por %p73, %p74
      %s76 = sld [smem:[#allocation3 + %s21]]
      %s77 = sld [smem:[#allocation3 + %s28]]
      %s78 = ssub.s32 %s76, %s77
      %p79 = scmp.eq.s32.totalorder %s78, 0
      %s81 = sadd.s32 %s80, 1
      %s82 = scalar_select %p79, %s80, %s81
      %p85 = pneg %p79
      %p86 = scmp.eq.s32.totalorder %s21, 8
      %p87 = por %p85, %p86
      %p88 = scmp.ne.s32.totalorder %s80, %s83
      %p89 = scmp.eq.s32.totalorder %s21, 0
      %p90 = por %p88, %p89
      %p91 = scmp.ne.s32.totalorder %s80, %s83
      %p92 = scmp.eq.s32.totalorder %s26, 8
      %p93 = por %p91, %p92
      %p94 = scmp.ne.s32.totalorder %s83, %s84
      %p95 = scmp.eq.s32.totalorder %s26, 0
      %p96 = por %p94, %p95
      %p97 = scmp.ne.s32.totalorder %s83, %s84
      %p98 = scmp.eq.s32.totalorder %s27, 8
      %p99 = por %p97, %p98
      %p101 = scmp.ne.s32.totalorder %s84, %s100
      %p102 = scmp.eq.s32.totalorder %s27, 0
      %p103 = por %p101, %p102
      %s104 = ssub.s32 %s21, %s28
      %p105 = scmp.eq.s32.totalorder %s104, 0
      %s107 = sadd.s32 %s106, 1
      %s108 = scalar_select %p105, %s106, %s107
      %p111 = pneg %p105
      %p112 = scmp.eq.s32.totalorder %s21, 8
      %p113 = por %p111, %p112
      %p114 = scmp.ne.s32.totalorder %s106, %s109
      %p115 = scmp.eq.s32.totalorder %s21, 0
      %p116 = por %p114, %p115
      %p117 = scmp.ne.s32.totalorder %s106, %s109
      %p118 = scmp.eq.s32.totalorder %s26, 8
      %p119 = por %p117, %p118
      %p120 = scmp.ne.s32.totalorder %s109, %s110
      %p121 = scmp.eq.s32.totalorder %s26, 0
      %p122 = por %p120, %p121
      %p123 = scmp.ne.s32.totalorder %s109, %s110
      %p124 = scmp.eq.s32.totalorder %s27, 8
      %p125 = por %p123, %p124
      %p127 = scmp.ne.s32.totalorder %s110, %s126
      %p128 = scmp.eq.s32.totalorder %s27, 0
      %p129 = por %p127, %p128
      %p130 = scmp.le.s32.totalorder 1, %s21
      %p131 = scmp.lt.s32.totalorder %s21, 10
      %p132 = pnand %p130, %p131
      %p133 = pneg %p132
      // Predicated region
      $region9: #{tpu_custom_call.1} parent=5 // pred_check
        _
      $region10: #{tpu_custom_call.1} parent=5 // pred_check_branch
        %135 = sbr.rel (%p132) target = $region12
      $region11: #{tpu_custom_call.1} parent=5 // pred_region
        %s136 = ssub.s32 %s21, 1
        // Predicated region
        $region13: #{tpu_custom_call.1} parent=11 // pred_check
          %p137 = pneg %p68
        $region14: #{tpu_custom_call.1} parent=11 // pred_check_branch
          %139 = sbr.rel (%p137) target = $region16
        $region15: #{tpu_custom_call.1} parent=11 // pred_region
          _
        $region16: #{tpu_custom_call.1} parent=11 // pred_fallthru
          _
      $region12: #{tpu_custom_call.1} parent=5 // pred_fallthru
        _
      %p140 = scmp.lt.s32.totalorder %s21, 9
      // Predicated region
      $region17: #{tpu_custom_call.1} parent=5 // pred_check
        %p141 = pneg %p140
      $region18: #{tpu_custom_call.1} parent=5 // pred_check_branch
        %143 = sbr.rel (%p141) target = $region20
      $region19: #{tpu_custom_call.1} parent=5 // pred_region
        // Predicated region
        $region21: #{tpu_custom_call.1} parent=19 // pred_check
          %p144 = pneg %p41
        $region22: #{tpu_custom_call.1} parent=19 // pred_check_branch
          %146 = sbr.rel (%p144) target = $region24
        $region23: #{tpu_custom_call.1} parent=19 // pred_region
          %p147 = scmp.lt.s32.totalorder %s21, 8
          %s148 = scalar_select %p147, %s21, 8
          %s149 = smul.addr %s148, 2
          %s150 = scalar_lea.vmem %s1, %s149
        $region24: #{tpu_custom_call.1} parent=19 // pred_fallthru
          _
        // Predicated region
        $region25: #{tpu_custom_call.1} parent=19 // pred_check
          %p151 = pneg %p90
        $region26: #{tpu_custom_call.1} parent=19 // pred_check_branch
          %153 = sbr.rel (%p151) target = $region28
        $region27: #{tpu_custom_call.1} parent=19 // pred_region
          %s154 = sld [smem:[#allocation3 + %s21]]
          %p155 = scmp.lt.s32.totalorder %s154, 2
          %s156 = scalar_select %p155, %s154, 2
          %s157 = smul.addr %s156, 32
          %s158 = smul.addr %s157, 8
          %s159 = scalar_lea.vmem %s3, %s158
          %s160 = sld [smem:[#allocation3 + %s21]]
        $region28: #{tpu_custom_call.1} parent=19 // pred_fallthru
          _
      $region20: #{tpu_custom_call.1} parent=5 // pred_fallthru
        _
      %p161 = scmp.le.s32.totalorder 1, %s21
      %p162 = scmp.lt.s32.totalorder %s21, 10
      %p163 = pnand %p161, %p162
      %p164 = pneg %p163
      // Predicated region
      $region29: #{tpu_custom_call.1} parent=5 // pred_check
        _
      $region30: #{tpu_custom_call.1} parent=5 // pred_check_branch
        %166 = sbr.rel (%p163) target = $region32
      $region31: #{tpu_custom_call.1} parent=5 // pred_region
        %s167 = ssub.s32 %s21, 1
        %p168 = scmp.lt.s32.totalorder %s26, 8
        %s169 = scalar_select %p168, %s26, 8
        %s170 = smul.addr %s169, 2
        %s171 = scalar_lea.vmem %s1, %s170
        %p172 = pneg %p47
        %p173 = pneg %p44
        %p174 = pneg %p68
        %p175 = pneg %p65
        %s176 = sld [smem:[#allocation3 + %s26]]
        %p177 = scmp.lt.s32.totalorder %s176, 2
        %s178 = scalar_select %p177, %s176, 2
        %s179 = smul.addr %s178, 32
        %s180 = smul.addr %s179, 8
        %s181 = scalar_lea.vmem %s3, %s180
        %p182 = pneg %p96
        %p183 = pneg %p93
        %p184 = pneg %p122
        %p185 = pneg %p119
        %s186 = sand.u32 %s109, 1
        %s187 = scalar_lea.sflag [#allocation5], %s186
        %s188 = sand.u32 %s109, 1
        %s189 = scalar_lea.vmem [#allocation4], %s188
        %p190 = scmp.lt.s32.totalorder %s26, 8
        %s191 = scalar_select %p190, %s26, 8
        %s192 = smul.addr %s191, 2
        %s193 = scalar_lea.vmem %s1, %s192
        %s194 = sld [smem:[#allocation3 + %s26]]
        %p195 = scmp.lt.s32.totalorder %s194, 2
        %s196 = scalar_select %p195, %s194, 2
        %s197 = smul.addr %s196, 32
        %s198 = smul.addr %s197, 8
        %s199 = scalar_lea.vmem %s3, %s198
        %s200 = sld [smem:[#allocation3 + %s26]]
        %v201 = vld [vmem:[%s193] sm:$0x3]
        %v202 = vlaneseq
        %v203 = vshrl.u32 %v202, 7
        %v204 = vadd.s32 %v203, 8
        %v205 = vadd.s32 %v203, 16
        %v206 = vadd.s32 %v203, 24
        %v207 = vadd.s32 %v203, 32
        %v208 = vadd.s32 %v203, 40
        %v209 = vadd.s32 %v203, 48
        %v210 = vadd.s32 %v203, 56
        %v211 = vadd.s32 %v203, 64
        %v212 = vadd.s32 %v203, 72
        %v213 = vadd.s32 %v203, 80
        %v214 = vadd.s32 %v203, 88
        %v215 = vadd.s32 %v203, 96
        %v216 = vadd.s32 %v203, 104
        %v217 = vadd.s32 %v203, 112
        %v218 = vadd.s32 %v203, 120
        %v219 = vld [vmem:[%s2] sm:$0xf]
        %v220 = vld [vmem:[%s2 + $0x4] sm:$0xf]
        %v221 = vld [vmem:[%s2 + $0x8] sm:$0xf]
        %v222 = vld [vmem:[%s2 + $0xc] sm:$0xf]
        %v223 = vld [vmem:[%s2 + $0x10] sm:$0xf]
        %v224 = vld [vmem:[%s2 + $0x14] sm:$0xf]
        %v225 = vld [vmem:[%s2 + $0x18] sm:$0xf]
        %v226 = vld [vmem:[%s2 + $0x1c] sm:$0xf]
        %v227 = vld [vmem:[%s2 + $0x20] sm:$0xf]
        %v228 = vld [vmem:[%s2 + $0x24] sm:$0xf]
        %v229 = vld [vmem:[%s2 + $0x28] sm:$0xf]
        %v230 = vld [vmem:[%s2 + $0x2c] sm:$0xf]
        %v231 = vld [vmem:[%s2 + $0x30] sm:$0xf]
        %v232 = vld [vmem:[%s2 + $0x34] sm:$0xf]
        %v233 = vld [vmem:[%s2 + $0x38] sm:$0xf]
        %v234 = vld [vmem:[%s2 + $0x3c] sm:$0xf]
        %v235 = vld [vmem:[%s2 + $0x40] sm:$0xf]
        %v236 = vld [vmem:[%s2 + $0x44] sm:$0xf]
        %v237 = vld [vmem:[%s2 + $0x48] sm:$0xf]
        %v238 = vld [vmem:[%s2 + $0x4c] sm:$0xf]
        %v239 = vld [vmem:[%s2 + $0x50] sm:$0xf]
        %v240 = vld [vmem:[%s2 + $0x54] sm:$0xf]
        %v241 = vld [vmem:[%s2 + $0x58] sm:$0xf]
        %v242 = vld [vmem:[%s2 + $0x5c] sm:$0xf]
        %v243 = vld [vmem:[%s2 + $0x60] sm:$0xf]
        %v244 = vld [vmem:[%s2 + $0x64] sm:$0xf]
        %v245 = vld [vmem:[%s2 + $0x68] sm:$0xf]
        %v246 = vld [vmem:[%s2 + $0x6c] sm:$0xf]
        %v247 = vld [vmem:[%s2 + $0x70] sm:$0xf]
        %v248 = vld [vmem:[%s2 + $0x74] sm:$0xf]
        %v249 = vld [vmem:[%s2 + $0x78] sm:$0xf]
        %v250 = vld [vmem:[%s2 + $0x7c] sm:$0xf]
        %s251 = scalar_lea.vmem %s2, 128
        %v252 = vld [vmem:[%s251] sm:$0xf]
        %v253 = vld [vmem:[%s251 + $0x4] sm:$0xf]
        %v254 = vld [vmem:[%s251 + $0x8] sm:$0xf]
        %v255 = vld [vmem:[%s251 + $0xc] sm:$0xf]
        %v256 = vld [vmem:[%s251 + $0x10] sm:$0xf]
        %v257 = vld [vmem:[%s251 + $0x14] sm:$0xf]
        %v258 = vld [vmem:[%s251 + $0x18] sm:$0xf]
        %v259 = vld [vmem:[%s251 + $0x1c] sm:$0xf]
        %v260 = vld [vmem:[%s251 + $0x20] sm:$0xf]
        %v261 = vld [vmem:[%s251 + $0x24] sm:$0xf]
        %v262 = vld [vmem:[%s251 + $0x28] sm:$0xf]
        %v263 = vld [vmem:[%s251 + $0x2c] sm:$0xf]
        %v264 = vld [vmem:[%s251 + $0x30] sm:$0xf]
        %v265 = vld [vmem:[%s251 + $0x34] sm:$0xf]
        %v266 = vld [vmem:[%s251 + $0x38] sm:$0xf]
        %v267 = vld [vmem:[%s251 + $0x3c] sm:$0xf]
        %v268 = vld [vmem:[%s251 + $0x40] sm:$0xf]
        %v269 = vld [vmem:[%s251 + $0x44] sm:$0xf]
        %v270 = vld [vmem:[%s251 + $0x48] sm:$0xf]
        %v271 = vld [vmem:[%s251 + $0x4c] sm:$0xf]
        %v272 = vld [vmem:[%s251 + $0x50] sm:$0xf]
        %v273 = vld [vmem:[%s251 + $0x54] sm:$0xf]
        %v274 = vld [vmem:[%s251 + $0x58] sm:$0xf]
        %v275 = vld [vmem:[%s251 + $0x5c] sm:$0xf]
        %v276 = vld [vmem:[%s251 + $0x60] sm:$0xf]
        %v277 = vld [vmem:[%s251 + $0x64] sm:$0xf]
        %v278 = vld [vmem:[%s251 + $0x68] sm:$0xf]
        %v279 = vld [vmem:[%s251 + $0x6c] sm:$0xf]
        %v280 = vld [vmem:[%s251 + $0x70] sm:$0xf]
        %v281 = vld [vmem:[%s251 + $0x74] sm:$0xf]
        %v282 = vld [vmem:[%s251 + $0x78] sm:$0xf]
        %v283 = vld [vmem:[%s251 + $0x7c] sm:$0xf]
        %v284 = vperm.slane %v201, 0
        %vm285 = vcmp.eq.s32.totalorder %v203, %v284
        %vm286 = vcmp.eq.s32.totalorder %v204, %v284
        %vm287 = vcmp.eq.s32.totalorder %v205, %v284
        %vm288 = vcmp.eq.s32.totalorder %v206, %v284
        %vm289 = vcmp.eq.s32.totalorder %v207, %v284
        %vm290 = vcmp.eq.s32.totalorder %v208, %v284
        %vm291 = vcmp.eq.s32.totalorder %v209, %v284
        %vm292 = vcmp.eq.s32.totalorder %v210, %v284
        %vm293 = vcmp.eq.s32.totalorder %v211, %v284
        %vm294 = vcmp.eq.s32.totalorder %v212, %v284
        %vm295 = vcmp.eq.s32.totalorder %v213, %v284
        %vm296 = vcmp.eq.s32.totalorder %v214, %v284
        %vm297 = vcmp.eq.s32.totalorder %v215, %v284
        %vm298 = vcmp.eq.s32.totalorder %v216, %v284
        %vm299 = vcmp.eq.s32.totalorder %v217, %v284
        %vm300 = vcmp.eq.s32.totalorder %v218, %v284
        %v301 = vsel %vm285, 1.0, 0.0
        %v302 = vsel %vm286, 1.0, 0.0
        %v303 = vsel %vm287, 1.0, 0.0
        %v304 = vsel %vm288, 1.0, 0.0
        %v305 = vsel %vm289, 1.0, 0.0
        %v306 = vsel %vm290, 1.0, 0.0
        %v307 = vsel %vm291, 1.0, 0.0
        %v308 = vsel %vm292, 1.0, 0.0
        %v309 = vsel %vm293, 1.0, 0.0
        %v310 = vsel %vm294, 1.0, 0.0
        %v311 = vsel %vm295, 1.0, 0.0
        %v312 = vsel %vm296, 1.0, 0.0
        %v313 = vsel %vm297, 1.0, 0.0
        %v314 = vsel %vm298, 1.0, 0.0
        %v315 = vsel %vm299, 1.0, 0.0
        %v316 = vsel %vm300, 1.0, 0.0
        %v317 = vpack.c.bf16 %v302, %v301
        %v318 = vpack.c.bf16 %v304, %v303
        %v319 = vpack.c.bf16 %v306, %v305
        %v320 = vpack.c.bf16 %v308, %v307
        %v321 = vpack.c.bf16 %v310, %v309
        %v322 = vpack.c.bf16 %v312, %v311
        %v323 = vpack.c.bf16 %v314, %v313
        %v324 = vpack.c.bf16 %v316, %v315
        %v357 = vunpack.c.l.b16 %v252
        %v358 = vunpack.c.l.b16 %v253
        %v359 = vunpack.c.l.b16 %v254
        %v360 = vunpack.c.l.b16 %v255
        %v361 = vunpack.c.l.b16 %v256
        %v362 = vunpack.c.l.b16 %v257
        %v363 = vunpack.c.l.b16 %v258
        %v364 = vunpack.c.l.b16 %v259
        %v365 = vunpack.c.l.b16 %v260
        %v366 = vunpack.c.l.b16 %v261
        %v367 = vunpack.c.l.b16 %v262
        %v368 = vunpack.c.l.b16 %v263
        %v369 = vunpack.c.l.b16 %v264
        %v370 = vunpack.c.l.b16 %v265
        %v371 = vunpack.c.l.b16 %v266
        %v372 = vunpack.c.l.b16 %v267
        %v373 = vunpack.c.l.b16 %v268
        %v374 = vunpack.c.l.b16 %v269
        %v375 = vunpack.c.l.b16 %v270
        %v376 = vunpack.c.l.b16 %v271
        %v377 = vunpack.c.l.b16 %v272
        %v378 = vunpack.c.l.b16 %v273
        %v379 = vunpack.c.l.b16 %v274
        %v380 = vunpack.c.l.b16 %v275
        %v381 = vunpack.c.l.b16 %v276
        %v382 = vunpack.c.l.b16 %v277
        %v383 = vunpack.c.l.b16 %v278
        %v384 = vunpack.c.l.b16 %v279
        %v385 = vunpack.c.l.b16 %v280
        %v386 = vunpack.c.l.b16 %v281
        %v387 = vunpack.c.l.b16 %v282
        %v388 = vunpack.c.l.b16 %v283
        %v389 = vpack.c.b16 %v358, %v357
        %v390 = vpack.c.b16 %v360, %v359
        %v391 = vpack.c.b16 %v362, %v361
        %v392 = vpack.c.b16 %v364, %v363
        %v393 = vpack.c.b16 %v366, %v365
        %v394 = vpack.c.b16 %v368, %v367
        %v395 = vpack.c.b16 %v370, %v369
        %v396 = vpack.c.b16 %v372, %v371
        %v397 = vpack.c.b16 %v374, %v373
        %v398 = vpack.c.b16 %v376, %v375
        %v399 = vpack.c.b16 %v378, %v377
        %v400 = vpack.c.b16 %v380, %v379
        %v401 = vpack.c.b16 %v382, %v381
        %v402 = vpack.c.b16 %v384, %v383
        %v403 = vpack.c.b16 %v386, %v385
        %v404 = vpack.c.b16 %v388, %v387
        %421 = vmatpush.bf16.msra.mxu0 %v324
        %422 = vmatpush.bf16.msra.mxu0 %v323
        %423 = vmatpush.bf16.msra.mxu0 %v322
        %424 = vmatpush.bf16.msra.mxu0 %v321
        %425 = vmatpush.bf16.msra.mxu0 %v320
        %426 = vmatpush.bf16.msra.mxu0 %v319
        %427 = vmatpush.bf16.msra.mxu0 %v318
        %428 = vmatpush.bf16.msra.mxu0 %v317
        %429 = vmatmul.bf16.gmra.mxu0 %v389
        %v430 = vpop.f32.mrf.mxu0
        %v431 = vadd.f32 0.0, %v430
        %v432 = vpop.f32.mrf.mxu0
        %v433 = vadd.f32 0.0, %v432
        %434 = vmatmul.bf16.gmra.mxu0 %v390
        %v435 = vpop.f32.mrf.mxu0
        %v436 = vadd.f32 0.0, %v435
        %v437 = vpop.f32.mrf.mxu0
        %v438 = vadd.f32 0.0, %v437
        %439 = vmatmul.bf16.gmra.mxu0 %v391
        %v440 = vpop.f32.mrf.mxu0
        %v441 = vadd.f32 0.0, %v440
        %v442 = vpop.f32.mrf.mxu0
        %v443 = vadd.f32 0.0, %v442
        %444 = vmatmul.bf16.gmra.mxu0 %v392
        %v445 = vpop.f32.mrf.mxu0
        %v446 = vadd.f32 0.0, %v445
        %v447 = vpop.f32.mrf.mxu0
        %v448 = vadd.f32 0.0, %v447
        %449 = vmatmul.bf16.gmra.mxu0 %v393
        %v450 = vpop.f32.mrf.mxu0
        %v451 = vadd.f32 0.0, %v450
        %v452 = vpop.f32.mrf.mxu0
        %v453 = vadd.f32 0.0, %v452
        %454 = vmatmul.bf16.gmra.mxu0 %v394
        %v455 = vpop.f32.mrf.mxu0
        %v456 = vadd.f32 0.0, %v455
        %v457 = vpop.f32.mrf.mxu0
        %v458 = vadd.f32 0.0, %v457
        %459 = vmatmul.bf16.gmra.mxu0 %v395
        %v460 = vpop.f32.mrf.mxu0
        %v461 = vadd.f32 0.0, %v460
        %v462 = vpop.f32.mrf.mxu0
        %v463 = vadd.f32 0.0, %v462
        %464 = vmatmul.bf16.gmra.mxu0 %v396
        %v465 = vpop.f32.mrf.mxu0
        %v466 = vadd.f32 0.0, %v465
        %v467 = vpop.f32.mrf.mxu0
        %v468 = vadd.f32 0.0, %v467
        %469 = vmatmul.bf16.gmra.mxu0 %v397
        %v470 = vpop.f32.mrf.mxu0
        %v471 = vadd.f32 0.0, %v470
        %v472 = vpop.f32.mrf.mxu0
        %v473 = vadd.f32 0.0, %v472
        %474 = vmatmul.bf16.gmra.mxu0 %v398
        %v475 = vpop.f32.mrf.mxu0
        %v476 = vadd.f32 0.0, %v475
        %v477 = vpop.f32.mrf.mxu0
        %v478 = vadd.f32 0.0, %v477
        %479 = vmatmul.bf16.gmra.mxu0 %v399
        %v480 = vpop.f32.mrf.mxu0
        %v481 = vadd.f32 0.0, %v480
        %v482 = vpop.f32.mrf.mxu0
        %v483 = vadd.f32 0.0, %v482
        %484 = vmatmul.bf16.gmra.mxu0 %v400
        %v485 = vpop.f32.mrf.mxu0
        %v486 = vadd.f32 0.0, %v485
        %v487 = vpop.f32.mrf.mxu0
        %v488 = vadd.f32 0.0, %v487
        %489 = vmatmul.bf16.gmra.mxu0 %v401
        %v490 = vpop.f32.mrf.mxu0
        %v491 = vadd.f32 0.0, %v490
        %v492 = vpop.f32.mrf.mxu0
        %v493 = vadd.f32 0.0, %v492
        %494 = vmatmul.bf16.gmra.mxu0 %v402
        %v495 = vpop.f32.mrf.mxu0
        %v496 = vadd.f32 0.0, %v495
        %v497 = vpop.f32.mrf.mxu0
        %v498 = vadd.f32 0.0, %v497
        %499 = vmatmul.bf16.gmra.mxu0 %v403
        %v500 = vpop.f32.mrf.mxu0
        %v501 = vadd.f32 0.0, %v500
        %v502 = vpop.f32.mrf.mxu0
        %v503 = vadd.f32 0.0, %v502
        %504 = vmatmul.bf16.gmra.mxu0 %v404
        %v505 = vpop.f32.mrf.mxu0
        %v506 = vadd.f32 0.0, %v505
        %v507 = vpop.f32.mrf.mxu0
        %v508 = vadd.f32 0.0, %v507
        %509 = vdwg.mxu0
        %v542 = vunpack.c.l.b16 %v219
        %v543 = vunpack.c.l.b16 %v220
        %v544 = vunpack.c.l.b16 %v221
        %v545 = vunpack.c.l.b16 %v222
        %v546 = vunpack.c.l.b16 %v223
        %v547 = vunpack.c.l.b16 %v224
        %v548 = vunpack.c.l.b16 %v225
        %v549 = vunpack.c.l.b16 %v226
        %v550 = vunpack.c.l.b16 %v227
        %v551 = vunpack.c.l.b16 %v228
        %v552 = vunpack.c.l.b16 %v229
        %v553 = vunpack.c.l.b16 %v230
        %v554 = vunpack.c.l.b16 %v231
        %v555 = vunpack.c.l.b16 %v232
        %v556 = vunpack.c.l.b16 %v233
        %v557 = vunpack.c.l.b16 %v234
        %v558 = vunpack.c.l.b16 %v235
        %v559 = vunpack.c.l.b16 %v236
        %v560 = vunpack.c.l.b16 %v237
        %v561 = vunpack.c.l.b16 %v238
        %v562 = vunpack.c.l.b16 %v239
        %v563 = vunpack.c.l.b16 %v240
        %v564 = vunpack.c.l.b16 %v241
        %v565 = vunpack.c.l.b16 %v242
        %v566 = vunpack.c.l.b16 %v243
        %v567 = vunpack.c.l.b16 %v244
        %v568 = vunpack.c.l.b16 %v245
        %v569 = vunpack.c.l.b16 %v246
        %v570 = vunpack.c.l.b16 %v247
        %v571 = vunpack.c.l.b16 %v248
        %v572 = vunpack.c.l.b16 %v249
        %v573 = vunpack.c.l.b16 %v250
        %v574 = vpack.c.b16 %v543, %v542
        %v575 = vpack.c.b16 %v545, %v544
        %v576 = vpack.c.b16 %v547, %v546
        %v577 = vpack.c.b16 %v549, %v548
        %v578 = vpack.c.b16 %v551, %v550
        %v579 = vpack.c.b16 %v553, %v552
        %v580 = vpack.c.b16 %v555, %v554
        %v581 = vpack.c.b16 %v557, %v556
        %v582 = vpack.c.b16 %v559, %v558
        %v583 = vpack.c.b16 %v561, %v560
        %v584 = vpack.c.b16 %v563, %v562
        %v585 = vpack.c.b16 %v565, %v564
        %v586 = vpack.c.b16 %v567, %v566
        %v587 = vpack.c.b16 %v569, %v568
        %v588 = vpack.c.b16 %v571, %v570
        %v589 = vpack.c.b16 %v573, %v572
        %606 = vmatpush.bf16.msra.mxu0 %v324
        %607 = vmatpush.bf16.msra.mxu0 %v323
        %608 = vmatpush.bf16.msra.mxu0 %v322
        %609 = vmatpush.bf16.msra.mxu0 %v321
        %610 = vmatpush.bf16.msra.mxu0 %v320
        %611 = vmatpush.bf16.msra.mxu0 %v319
        %612 = vmatpush.bf16.msra.mxu0 %v318
        %613 = vmatpush.bf16.msra.mxu0 %v317
        %614 = vmatmul.bf16.gmra.mxu0 %v574
        %v615 = vpop.f32.mrf.mxu0
        %v616 = vadd.f32 %v431, %v615
        %v617 = vpop.f32.mrf.mxu0
        %v618 = vadd.f32 %v433, %v617
        %619 = vmatmul.bf16.gmra.mxu0 %v575
        %v620 = vpop.f32.mrf.mxu0
        %v621 = vadd.f32 %v436, %v620
        %v622 = vpop.f32.mrf.mxu0
        %v623 = vadd.f32 %v438, %v622
        %624 = vmatmul.bf16.gmra.mxu0 %v576
        %v625 = vpop.f32.mrf.mxu0
        %v626 = vadd.f32 %v441, %v625
        %v627 = vpop.f32.mrf.mxu0
        %v628 = vadd.f32 %v443, %v627
        %629 = vmatmul.bf16.gmra.mxu0 %v577
        %v630 = vpop.f32.mrf.mxu0
        %v631 = vadd.f32 %v446, %v630
        %v632 = vpop.f32.mrf.mxu0
        %v633 = vadd.f32 %v448, %v632
        %634 = vmatmul.bf16.gmra.mxu0 %v578
        %v635 = vpop.f32.mrf.mxu0
        %v636 = vadd.f32 %v451, %v635
        %v637 = vpop.f32.mrf.mxu0
        %v638 = vadd.f32 %v453, %v637
        %639 = vmatmul.bf16.gmra.mxu0 %v579
        %v640 = vpop.f32.mrf.mxu0
        %v641 = vadd.f32 %v456, %v640
        %v642 = vpop.f32.mrf.mxu0
        %v643 = vadd.f32 %v458, %v642
        %644 = vmatmul.bf16.gmra.mxu0 %v580
        %v645 = vpop.f32.mrf.mxu0
        %v646 = vadd.f32 %v461, %v645
        %v647 = vpop.f32.mrf.mxu0
        %v648 = vadd.f32 %v463, %v647
        %649 = vmatmul.bf16.gmra.mxu0 %v581
        %v650 = vpop.f32.mrf.mxu0
        %v651 = vadd.f32 %v466, %v650
        %v652 = vpop.f32.mrf.mxu0
        %v653 = vadd.f32 %v468, %v652
        %654 = vmatmul.bf16.gmra.mxu0 %v582
        %v655 = vpop.f32.mrf.mxu0
        %v656 = vadd.f32 %v471, %v655
        %v657 = vpop.f32.mrf.mxu0
        %v658 = vadd.f32 %v473, %v657
        %659 = vmatmul.bf16.gmra.mxu0 %v583
        %v660 = vpop.f32.mrf.mxu0
        %v661 = vadd.f32 %v476, %v660
        %v662 = vpop.f32.mrf.mxu0
        %v663 = vadd.f32 %v478, %v662
        %664 = vmatmul.bf16.gmra.mxu0 %v584
        %v665 = vpop.f32.mrf.mxu0
        %v666 = vadd.f32 %v481, %v665
        %v667 = vpop.f32.mrf.mxu0
        %v668 = vadd.f32 %v483, %v667
        %669 = vmatmul.bf16.gmra.mxu0 %v585
        %v670 = vpop.f32.mrf.mxu0
        %v671 = vadd.f32 %v486, %v670
        %v672 = vpop.f32.mrf.mxu0
        %v673 = vadd.f32 %v488, %v672
        %674 = vmatmul.bf16.gmra.mxu0 %v586
        %v675 = vpop.f32.mrf.mxu0
        %v676 = vadd.f32 %v491, %v675
        %v677 = vpop.f32.mrf.mxu0
        %v678 = vadd.f32 %v493, %v677
        %679 = vmatmul.bf16.gmra.mxu0 %v587
        %v680 = vpop.f32.mrf.mxu0
        %v681 = vadd.f32 %v496, %v680
        %v682 = vpop.f32.mrf.mxu0
        %v683 = vadd.f32 %v498, %v682
        %684 = vmatmul.bf16.gmra.mxu0 %v588
        %v685 = vpop.f32.mrf.mxu0
        %v686 = vadd.f32 %v501, %v685
        %v687 = vpop.f32.mrf.mxu0
        %v688 = vadd.f32 %v503, %v687
        %689 = vmatmul.bf16.gmra.mxu0 %v589
        %v690 = vpop.f32.mrf.mxu0
        %v691 = vadd.f32 %v506, %v690
        %v692 = vpop.f32.mrf.mxu0
        %v693 = vadd.f32 %v508, %v692
        %694 = vdwg.mxu0
        %v695 = vperm.slane %v201, 1
        %vm696 = vcmp.eq.s32.totalorder %v203, %v695
        %vm697 = vcmp.eq.s32.totalorder %v204, %v695
        %vm698 = vcmp.eq.s32.totalorder %v205, %v695
        %vm699 = vcmp.eq.s32.totalorder %v206, %v695
        %vm700 = vcmp.eq.s32.totalorder %v207, %v695
        %vm701 = vcmp.eq.s32.totalorder %v208, %v695
        %vm702 = vcmp.eq.s32.totalorder %v209, %v695
        %vm703 = vcmp.eq.s32.totalorder %v210, %v695
        %vm704 = vcmp.eq.s32.totalorder %v211, %v695
        %vm705 = vcmp.eq.s32.totalorder %v212, %v695
        %vm706 = vcmp.eq.s32.totalorder %v213, %v695
        %vm707 = vcmp.eq.s32.totalorder %v214, %v695
        %vm708 = vcmp.eq.s32.totalorder %v215, %v695
        %vm709 = vcmp.eq.s32.totalorder %v216, %v695
        %vm710 = vcmp.eq.s32.totalorder %v217, %v695
        %vm711 = vcmp.eq.s32.totalorder %v218, %v695
        %v712 = vsel %vm696, 1.0, 0.0
        %v713 = vsel %vm697, 1.0, 0.0
        %v714 = vsel %vm698, 1.0, 0.0
        %v715 = vsel %vm699, 1.0, 0.0
        %v716 = vsel %vm700, 1.0, 0.0
        %v717 = vsel %vm701, 1.0, 0.0
        %v718 = vsel %vm702, 1.0, 0.0
        %v719 = vsel %vm703, 1.0, 0.0
        %v720 = vsel %vm704, 1.0, 0.0
        %v721 = vsel %vm705, 1.0, 0.0
        %v722 = vsel %vm706, 1.0, 0.0
        %v723 = vsel %vm707, 1.0, 0.0
        %v724 = vsel %vm708, 1.0, 0.0
        %v725 = vsel %vm709, 1.0, 0.0
        %v726 = vsel %vm710, 1.0, 0.0
        %v727 = vsel %vm711, 1.0, 0.0
        %v728 = vpack.c.bf16 %v713, %v712
        %v729 = vpack.c.bf16 %v715, %v714
        %v730 = vpack.c.bf16 %v717, %v716
        %v731 = vpack.c.bf16 %v719, %v718
        %v732 = vpack.c.bf16 %v721, %v720
        %v733 = vpack.c.bf16 %v723, %v722
        %v734 = vpack.c.bf16 %v725, %v724
        %v735 = vpack.c.bf16 %v727, %v726
        %736 = vmatpush.bf16.msra.mxu0 %v735
        %737 = vmatpush.bf16.msra.mxu0 %v734
        %738 = vmatpush.bf16.msra.mxu0 %v733
        %739 = vmatpush.bf16.msra.mxu0 %v732
        %740 = vmatpush.bf16.msra.mxu0 %v731
        %741 = vmatpush.bf16.msra.mxu0 %v730
        %742 = vmatpush.bf16.msra.mxu0 %v729
        %743 = vmatpush.bf16.msra.mxu0 %v728
        %744 = vmatmul.bf16.gmra.mxu0 %v389
        %v745 = vpop.f32.mrf.mxu0
        %v746 = vadd.f32 0.0, %v745
        %v747 = vpop.f32.mrf.mxu0
        %v748 = vadd.f32 0.0, %v747
        %749 = vmatmul.bf16.gmra.mxu0 %v390
        %v750 = vpop.f32.mrf.mxu0
        %v751 = vadd.f32 0.0, %v750
        %v752 = vpop.f32.mrf.mxu0
        %v753 = vadd.f32 0.0, %v752
        %754 = vmatmul.bf16.gmra.mxu0 %v391
        %v755 = vpop.f32.mrf.mxu0
        %v756 = vadd.f32 0.0, %v755
        %v757 = vpop.f32.mrf.mxu0
        %v758 = vadd.f32 0.0, %v757
        %759 = vmatmul.bf16.gmra.mxu0 %v392
        %v760 = vpop.f32.mrf.mxu0
        %v761 = vadd.f32 0.0, %v760
        %v762 = vpop.f32.mrf.mxu0
        %v763 = vadd.f32 0.0, %v762
        %764 = vmatmul.bf16.gmra.mxu0 %v393
        %v765 = vpop.f32.mrf.mxu0
        %v766 = vadd.f32 0.0, %v765
        %v767 = vpop.f32.mrf.mxu0
        %v768 = vadd.f32 0.0, %v767
        %769 = vmatmul.bf16.gmra.mxu0 %v394
        %v770 = vpop.f32.mrf.mxu0
        %v771 = vadd.f32 0.0, %v770
        %v772 = vpop.f32.mrf.mxu0
        %v773 = vadd.f32 0.0, %v772
        %774 = vmatmul.bf16.gmra.mxu0 %v395
        %v775 = vpop.f32.mrf.mxu0
        %v776 = vadd.f32 0.0, %v775
        %v777 = vpop.f32.mrf.mxu0
        %v778 = vadd.f32 0.0, %v777
        %779 = vmatmul.bf16.gmra.mxu0 %v396
        %v780 = vpop.f32.mrf.mxu0
        %v781 = vadd.f32 0.0, %v780
        %v782 = vpop.f32.mrf.mxu0
        %v783 = vadd.f32 0.0, %v782
        %784 = vmatmul.bf16.gmra.mxu0 %v397
        %v785 = vpop.f32.mrf.mxu0
        %v786 = vadd.f32 0.0, %v785
        %v787 = vpop.f32.mrf.mxu0
        %v788 = vadd.f32 0.0, %v787
        %789 = vmatmul.bf16.gmra.mxu0 %v398
        %v790 = vpop.f32.mrf.mxu0
        %v791 = vadd.f32 0.0, %v790
        %v792 = vpop.f32.mrf.mxu0
        %v793 = vadd.f32 0.0, %v792
        %794 = vmatmul.bf16.gmra.mxu0 %v399
        %v795 = vpop.f32.mrf.mxu0
        %v796 = vadd.f32 0.0, %v795
        %v797 = vpop.f32.mrf.mxu0
        %v798 = vadd.f32 0.0, %v797
        %799 = vmatmul.bf16.gmra.mxu0 %v400
        %v800 = vpop.f32.mrf.mxu0
        %v801 = vadd.f32 0.0, %v800
        %v802 = vpop.f32.mrf.mxu0
        %v803 = vadd.f32 0.0, %v802
        %804 = vmatmul.bf16.gmra.mxu0 %v401
        %v805 = vpop.f32.mrf.mxu0
        %v806 = vadd.f32 0.0, %v805
        %v807 = vpop.f32.mrf.mxu0
        %v808 = vadd.f32 0.0, %v807
        %809 = vmatmul.bf16.gmra.mxu0 %v402
        %v810 = vpop.f32.mrf.mxu0
        %v811 = vadd.f32 0.0, %v810
        %v812 = vpop.f32.mrf.mxu0
        %v813 = vadd.f32 0.0, %v812
        %814 = vmatmul.bf16.gmra.mxu0 %v403
        %v815 = vpop.f32.mrf.mxu0
        %v816 = vadd.f32 0.0, %v815
        %v817 = vpop.f32.mrf.mxu0
        %v818 = vadd.f32 0.0, %v817
        %819 = vmatmul.bf16.gmra.mxu0 %v404
        %v820 = vpop.f32.mrf.mxu0
        %v821 = vadd.f32 0.0, %v820
        %v822 = vpop.f32.mrf.mxu0
        %v823 = vadd.f32 0.0, %v822
        %824 = vdwg.mxu0
        %825 = vmatpush.bf16.msra.mxu0 %v735
        %826 = vmatpush.bf16.msra.mxu0 %v734
        %827 = vmatpush.bf16.msra.mxu0 %v733
        %828 = vmatpush.bf16.msra.mxu0 %v732
        %829 = vmatpush.bf16.msra.mxu0 %v731
        %830 = vmatpush.bf16.msra.mxu0 %v730
        %831 = vmatpush.bf16.msra.mxu0 %v729
        %832 = vmatpush.bf16.msra.mxu0 %v728
        %833 = vmatmul.bf16.gmra.mxu0 %v574
        %v834 = vpop.f32.mrf.mxu0
        %v835 = vadd.f32 %v746, %v834
        %v836 = vpop.f32.mrf.mxu0
        %v837 = vadd.f32 %v748, %v836
        %838 = vmatmul.bf16.gmra.mxu0 %v575
        %v839 = vpop.f32.mrf.mxu0
        %v840 = vadd.f32 %v751, %v839
        %v841 = vpop.f32.mrf.mxu0
        %v842 = vadd.f32 %v753, %v841
        %843 = vmatmul.bf16.gmra.mxu0 %v576
        %v844 = vpop.f32.mrf.mxu0
        %v845 = vadd.f32 %v756, %v844
        %v846 = vpop.f32.mrf.mxu0
        %v847 = vadd.f32 %v758, %v846
        %848 = vmatmul.bf16.gmra.mxu0 %v577
        %v849 = vpop.f32.mrf.mxu0
        %v850 = vadd.f32 %v761, %v849
        %v851 = vpop.f32.mrf.mxu0
        %v852 = vadd.f32 %v763, %v851
        %853 = vmatmul.bf16.gmra.mxu0 %v578
        %v854 = vpop.f32.mrf.mxu0
        %v855 = vadd.f32 %v766, %v854
        %v856 = vpop.f32.mrf.mxu0
        %v857 = vadd.f32 %v768, %v856
        %858 = vmatmul.bf16.gmra.mxu0 %v579
        %v859 = vpop.f32.mrf.mxu0
        %v860 = vadd.f32 %v771, %v859
        %v861 = vpop.f32.mrf.mxu0
        %v862 = vadd.f32 %v773, %v861
        %863 = vmatmul.bf16.gmra.mxu0 %v580
        %v864 = vpop.f32.mrf.mxu0
        %v865 = vadd.f32 %v776, %v864
        %v866 = vpop.f32.mrf.mxu0
        %v867 = vadd.f32 %v778, %v866
        %868 = vmatmul.bf16.gmra.mxu0 %v581
        %v869 = vpop.f32.mrf.mxu0
        %v870 = vadd.f32 %v781, %v869
        %v871 = vpop.f32.mrf.mxu0
        %v872 = vadd.f32 %v783, %v871
        %873 = vmatmul.bf16.gmra.mxu0 %v582
        %v874 = vpop.f32.mrf.mxu0
        %v875 = vadd.f32 %v786, %v874
        %v876 = vpop.f32.mrf.mxu0
        %v877 = vadd.f32 %v788, %v876
        %878 = vmatmul.bf16.gmra.mxu0 %v583
        %v879 = vpop.f32.mrf.mxu0
        %v880 = vadd.f32 %v791, %v879
        %v881 = vpop.f32.mrf.mxu0
        %v882 = vadd.f32 %v793, %v881
        %883 = vmatmul.bf16.gmra.mxu0 %v584
        %v884 = vpop.f32.mrf.mxu0
        %v885 = vadd.f32 %v796, %v884
        %v886 = vpop.f32.mrf.mxu0
        %v887 = vadd.f32 %v798, %v886
        %888 = vmatmul.bf16.gmra.mxu0 %v585
        %v889 = vpop.f32.mrf.mxu0
        %v890 = vadd.f32 %v801, %v889
        %v891 = vpop.f32.mrf.mxu0
        %v892 = vadd.f32 %v803, %v891
        %893 = vmatmul.bf16.gmra.mxu0 %v586
        %v894 = vpop.f32.mrf.mxu0
        %v895 = vadd.f32 %v806, %v894
        %v896 = vpop.f32.mrf.mxu0
        %v897 = vadd.f32 %v808, %v896
        %898 = vmatmul.bf16.gmra.mxu0 %v587
        %v899 = vpop.f32.mrf.mxu0
        %v900 = vadd.f32 %v811, %v899
        %v901 = vpop.f32.mrf.mxu0
        %v902 = vadd.f32 %v813, %v901
        %903 = vmatmul.bf16.gmra.mxu0 %v588
        %v904 = vpop.f32.mrf.mxu0
        %v905 = vadd.f32 %v816, %v904
        %v906 = vpop.f32.mrf.mxu0
        %v907 = vadd.f32 %v818, %v906
        %908 = vmatmul.bf16.gmra.mxu0 %v589
        %v909 = vpop.f32.mrf.mxu0
        %v910 = vadd.f32 %v821, %v909
        %v911 = vpop.f32.mrf.mxu0
        %v912 = vadd.f32 %v823, %v911
        %913 = vdwg.mxu0
        %v914 = vld [vmem:[%s199] sm:$0xff]
        %v915 = vld [vmem:[%s199 + $0x8] sm:$0xff]
        %v916 = vld [vmem:[%s199 + $0x10] sm:$0xff]
        %v917 = vld [vmem:[%s199 + $0x18] sm:$0xff]
        %v918 = vld [vmem:[%s199 + $0x20] sm:$0xff]
        %v919 = vld [vmem:[%s199 + $0x28] sm:$0xff]
        %v920 = vld [vmem:[%s199 + $0x30] sm:$0xff]
        %v921 = vld [vmem:[%s199 + $0x38] sm:$0xff]
        %v922 = vld [vmem:[%s199 + $0x40] sm:$0xff]
        %v923 = vld [vmem:[%s199 + $0x48] sm:$0xff]
        %v924 = vld [vmem:[%s199 + $0x50] sm:$0xff]
        %v925 = vld [vmem:[%s199 + $0x58] sm:$0xff]
        %v926 = vld [vmem:[%s199 + $0x60] sm:$0xff]
        %v927 = vld [vmem:[%s199 + $0x68] sm:$0xff]
        %v928 = vld [vmem:[%s199 + $0x70] sm:$0xff]
        %v929 = vld [vmem:[%s199 + $0x78] sm:$0xff]
        %v930 = vld [vmem:[%s199 + $0x80] sm:$0xff]
        %v931 = vld [vmem:[%s199 + $0x88] sm:$0xff]
        %v932 = vld [vmem:[%s199 + $0x90] sm:$0xff]
        %v933 = vld [vmem:[%s199 + $0x98] sm:$0xff]
        %v934 = vld [vmem:[%s199 + $0xa0] sm:$0xff]
        %v935 = vld [vmem:[%s199 + $0xa8] sm:$0xff]
        %v936 = vld [vmem:[%s199 + $0xb0] sm:$0xff]
        %v937 = vld [vmem:[%s199 + $0xb8] sm:$0xff]
        %v938 = vld [vmem:[%s199 + $0xc0] sm:$0xff]
        %v939 = vld [vmem:[%s199 + $0xc8] sm:$0xff]
        %v940 = vld [vmem:[%s199 + $0xd0] sm:$0xff]
        %v941 = vld [vmem:[%s199 + $0xd8] sm:$0xff]
        %v942 = vld [vmem:[%s199 + $0xe0] sm:$0xff]
        %v943 = vld [vmem:[%s199 + $0xe8] sm:$0xff]
        %v944 = vld [vmem:[%s199 + $0xf0] sm:$0xff]
        %v945 = vld [vmem:[%s199 + $0xf8] sm:$0xff]
        %947 = vset.pattern.permute.xlu0 0
        %948 = vperm.xlu0 %947, %v914
        %v949 = vpop.permute.xlu0 %948
        %952 = vset.pattern.permute.xlu0 0
        %953 = vperm.xlu0 %952, %v915
        %v954 = vpop.permute.xlu0 %953
        %957 = vset.pattern.permute.xlu0 0
        %958 = vperm.xlu0 %957, %v916
        %v959 = vpop.permute.xlu0 %958
        %962 = vset.pattern.permute.xlu0 0
        %963 = vperm.xlu0 %962, %v917
        %v964 = vpop.permute.xlu0 %963
        %967 = vset.pattern.permute.xlu0 0
        %968 = vperm.xlu0 %967, %v918
        %v969 = vpop.permute.xlu0 %968
        %972 = vset.pattern.permute.xlu0 0
        %973 = vperm.xlu0 %972, %v919
        %v974 = vpop.permute.xlu0 %973
        %977 = vset.pattern.permute.xlu0 0
        %978 = vperm.xlu0 %977, %v920
        %v979 = vpop.permute.xlu0 %978
        %982 = vset.pattern.permute.xlu0 0
        %983 = vperm.xlu0 %982, %v921
        %v984 = vpop.permute.xlu0 %983
        %987 = vset.pattern.permute.xlu0 0
        %988 = vperm.xlu0 %987, %v922
        %v989 = vpop.permute.xlu0 %988
        %992 = vset.pattern.permute.xlu0 0
        %993 = vperm.xlu0 %992, %v923
        %v994 = vpop.permute.xlu0 %993
        %997 = vset.pattern.permute.xlu0 0
        %998 = vperm.xlu0 %997, %v924
        %v999 = vpop.permute.xlu0 %998
        %1002 = vset.pattern.permute.xlu0 0
        %1003 = vperm.xlu0 %1002, %v925
        %v1004 = vpop.permute.xlu0 %1003
        %1007 = vset.pattern.permute.xlu0 0
        %1008 = vperm.xlu0 %1007, %v926
        %v1009 = vpop.permute.xlu0 %1008
        %1012 = vset.pattern.permute.xlu0 0
        %1013 = vperm.xlu0 %1012, %v927
        %v1014 = vpop.permute.xlu0 %1013
        %1017 = vset.pattern.permute.xlu0 0
        %1018 = vperm.xlu0 %1017, %v928
        %v1019 = vpop.permute.xlu0 %1018
        %1022 = vset.pattern.permute.xlu0 0
        %1023 = vperm.xlu0 %1022, %v929
        %v1024 = vpop.permute.xlu0 %1023
        %1027 = vset.pattern.permute.xlu0 0
        %1028 = vperm.xlu0 %1027, %v930
        %v1029 = vpop.permute.xlu0 %1028
        %1032 = vset.pattern.permute.xlu0 0
        %1033 = vperm.xlu0 %1032, %v931
        %v1034 = vpop.permute.xlu0 %1033
        %1037 = vset.pattern.permute.xlu0 0
        %1038 = vperm.xlu0 %1037, %v932
        %v1039 = vpop.permute.xlu0 %1038
        %1042 = vset.pattern.permute.xlu0 0
        %1043 = vperm.xlu0 %1042, %v933
        %v1044 = vpop.permute.xlu0 %1043
        %1047 = vset.pattern.permute.xlu0 0
        %1048 = vperm.xlu0 %1047, %v934
        %v1049 = vpop.permute.xlu0 %1048
        %1052 = vset.pattern.permute.xlu0 0
        %1053 = vperm.xlu0 %1052, %v935
        %v1054 = vpop.permute.xlu0 %1053
        %1057 = vset.pattern.permute.xlu0 0
        %1058 = vperm.xlu0 %1057, %v936
        %v1059 = vpop.permute.xlu0 %1058
        %1062 = vset.pattern.permute.xlu0 0
        %1063 = vperm.xlu0 %1062, %v937
        %v1064 = vpop.permute.xlu0 %1063
        %1067 = vset.pattern.permute.xlu0 0
        %1068 = vperm.xlu0 %1067, %v938
        %v1069 = vpop.permute.xlu0 %1068
        %1072 = vset.pattern.permute.xlu0 0
        %1073 = vperm.xlu0 %1072, %v939
        %v1074 = vpop.permute.xlu0 %1073
        %1077 = vset.pattern.permute.xlu0 0
        %1078 = vperm.xlu0 %1077, %v940
        %v1079 = vpop.permute.xlu0 %1078
        %1082 = vset.pattern.permute.xlu0 0
        %1083 = vperm.xlu0 %1082, %v941
        %v1084 = vpop.permute.xlu0 %1083
        %1087 = vset.pattern.permute.xlu0 0
        %1088 = vperm.xlu0 %1087, %v942
        %v1089 = vpop.permute.xlu0 %1088
        %1092 = vset.pattern.permute.xlu0 0
        %1093 = vperm.xlu0 %1092, %v943
        %v1094 = vpop.permute.xlu0 %1093
        %1097 = vset.pattern.permute.xlu0 0
        %1098 = vperm.xlu0 %1097, %v944
        %v1099 = vpop.permute.xlu0 %1098
        %1102 = vset.pattern.permute.xlu0 0
        %1103 = vperm.xlu0 %1102, %v945
        %v1104 = vpop.permute.xlu0 %1103
        %v1106 = vmul.f32 %v616, %v949
        %v1107 = vmul.f32 %v618, %v954
        %v1108 = vmul.f32 %v621, %v959
        %v1109 = vmul.f32 %v623, %v964
        %v1110 = vmul.f32 %v626, %v969
        %v1111 = vmul.f32 %v628, %v974
        %v1112 = vmul.f32 %v631, %v979
        %v1113 = vmul.f32 %v633, %v984
        %v1114 = vmul.f32 %v636, %v989
        %v1115 = vmul.f32 %v638, %v994
        %v1116 = vmul.f32 %v641, %v999
        %v1117 = vmul.f32 %v643, %v1004
        %v1118 = vmul.f32 %v646, %v1009
        %v1119 = vmul.f32 %v648, %v1014
        %v1120 = vmul.f32 %v651, %v1019
        %v1121 = vmul.f32 %v653, %v1024
        %v1122 = vmul.f32 %v656, %v1029
        %v1123 = vmul.f32 %v658, %v1034
        %v1124 = vmul.f32 %v661, %v1039
        %v1125 = vmul.f32 %v663, %v1044
        %v1126 = vmul.f32 %v666, %v1049
        %v1127 = vmul.f32 %v668, %v1054
        %v1128 = vmul.f32 %v671, %v1059
        %v1129 = vmul.f32 %v673, %v1064
        %v1130 = vmul.f32 %v676, %v1069
        %v1131 = vmul.f32 %v678, %v1074
        %v1132 = vmul.f32 %v681, %v1079
        %v1133 = vmul.f32 %v683, %v1084
        %v1134 = vmul.f32 %v686, %v1089
        %v1135 = vmul.f32 %v688, %v1094
        %v1136 = vmul.f32 %v691, %v1099
        %v1137 = vmul.f32 %v693, %v1104
        %v1138 = vmul.f32 %v1106, %v835
        %v1139 = vmul.f32 %v1107, %v837
        %v1140 = vmul.f32 %v1108, %v840
        %v1141 = vmul.f32 %v1109, %v842
        %v1142 = vmul.f32 %v1110, %v845
        %v1143 = vmul.f32 %v1111, %v847
        %v1144 = vmul.f32 %v1112, %v850
        %v1145 = vmul.f32 %v1113, %v852
        %v1146 = vmul.f32 %v1114, %v855
        %v1147 = vmul.f32 %v1115, %v857
        %v1148 = vmul.f32 %v1116, %v860
        %v1149 = vmul.f32 %v1117, %v862
        %v1150 = vmul.f32 %v1118, %v865
        %v1151 = vmul.f32 %v1119, %v867
        %v1152 = vmul.f32 %v1120, %v870
        %v1153 = vmul.f32 %v1121, %v872
        %v1154 = vmul.f32 %v1122, %v875
        %v1155 = vmul.f32 %v1123, %v877
        %v1156 = vmul.f32 %v1124, %v880
        %v1157 = vmul.f32 %v1125, %v882
        %v1158 = vmul.f32 %v1126, %v885
        %v1159 = vmul.f32 %v1127, %v887
        %v1160 = vmul.f32 %v1128, %v890
        %v1161 = vmul.f32 %v1129, %v892
        %v1162 = vmul.f32 %v1130, %v895
        %v1163 = vmul.f32 %v1131, %v897
        %v1164 = vmul.f32 %v1132, %v900
        %v1165 = vmul.f32 %v1133, %v902
        %v1166 = vmul.f32 %v1134, %v905
        %v1167 = vmul.f32 %v1135, %v907
        %v1168 = vmul.f32 %v1136, %v910
        %v1169 = vmul.f32 %v1137, %v912
        %v1170 = vadd.f32 %v1138, %v1139
        %v1171 = vadd.f32 %v1170, %v1140
        %v1172 = vadd.f32 %v1171, %v1141
        %v1173 = vadd.f32 %v1172, %v1142
        %v1174 = vadd.f32 %v1173, %v1143
        %v1175 = vadd.f32 %v1174, %v1144
        %v1176 = vadd.f32 %v1175, %v1145
        %v1177 = vadd.f32 %v1176, %v1146
        %v1178 = vadd.f32 %v1177, %v1147
        %v1179 = vadd.f32 %v1178, %v1148
        %v1180 = vadd.f32 %v1179, %v1149
        %v1181 = vadd.f32 %v1180, %v1150
        %v1182 = vadd.f32 %v1181, %v1151
        %v1183 = vadd.f32 %v1182, %v1152
        %v1184 = vadd.f32 %v1183, %v1153
        %v1185 = vadd.f32 %v1184, %v1154
        %v1186 = vadd.f32 %v1185, %v1155
        %v1187 = vadd.f32 %v1186, %v1156
        %v1188 = vadd.f32 %v1187, %v1157
        %v1189 = vadd.f32 %v1188, %v1158
        %v1190 = vadd.f32 %v1189, %v1159
        %v1191 = vadd.f32 %v1190, %v1160
        %v1192 = vadd.f32 %v1191, %v1161
        %v1193 = vadd.f32 %v1192, %v1162
        %v1194 = vadd.f32 %v1193, %v1163
        %v1195 = vadd.f32 %v1194, %v1164
        %v1196 = vadd.f32 %v1195, %v1165
        %v1197 = vadd.f32 %v1196, %v1166
        %v1198 = vadd.f32 %v1197, %v1167
        %v1199 = vadd.f32 %v1198, %v1168
        %v1200 = vadd.f32 %v1199, %v1169
        %v1201 = vrot.slane %v1200, 4
        %v1202 = vadd.f32 %v1200, %v1201
        %v1203 = vrot.slane %v1202, 2
        %v1204 = vadd.f32 %v1202, %v1203
        %v1205 = vrot.slane %v1204, 1
        %v1206 = vadd.f32 %v1204, %v1205
        %1207 = vst [vmem:[%s189] sm:$0x1] %v1206
        %s1208 = sand.u32 %s109, 1
        %s1209 = scalar_lea.sflag [#allocation5], %s1208
        %s1210 = sand.u32 %s109, 1
        %s1211 = scalar_lea.vmem [#allocation4], %s1210
        // Predicated region
        $region33: #{tpu_custom_call.1} parent=31 // pred_check
          %p1212 = pneg %p119
        $region34: #{tpu_custom_call.1} parent=31 // pred_check_branch
          %1214 = sbr.rel (%p1212) target = $region36
        $region35: #{tpu_custom_call.1} parent=31 // pred_region
          %1216 = vsyncadd %s1209, 0
          %s1217 = scalar_lea.hbm %s4, %s26
          %s1219 = sshll.u32 %s1211, 4
          %s1220 = int_to_ptr.vmem [resolvable:$true] %s1219
          %s1221 = sshll.u32 %s1217, 4
          %s1222 = int_to_ptr.hbm [resolvable:$true] %s1221
          %1224 = dma.vmem_to_hbm [thread:$0]  %s1220, 16, %s1222, %s1209
        $region36: #{tpu_custom_call.1} parent=31 // pred_fallthru
          _
      $region32: #{tpu_custom_call.1} parent=5 // pred_fallthru
        _
      %p1225 = scmp.le.s32.totalorder 2, %s21
      // Predicated region
      $region37: #{tpu_custom_call.1} parent=5 // pred_check
        %p1226 = pneg %p1225
      $region38: #{tpu_custom_call.1} parent=5 // pred_check_branch
        %1228 = sbr.rel (%p1226) target = $region40
      $region39: #{tpu_custom_call.1} parent=5 // pred_region
        %s1229 = ssub.s32 %s21, 2
        // Predicated region
        $region41: #{tpu_custom_call.1} parent=39 // pred_check
          %p1230 = pneg %p125
        $region42: #{tpu_custom_call.1} parent=39 // pred_check_branch
          %1232 = sbr.rel (%p1230) target = $region44
        $region43: #{tpu_custom_call.1} parent=39 // pred_region
          %s1233 = sand.u32 %s110, 1
          %s1234 = scalar_lea.sflag [#allocation5], %s1233
          %s1235 = sand.u32 %s110, 1
          %s1236 = scalar_lea.vmem [#allocation4], %s1235
          %1238 = dma.done %s1234, 16
        $region44: #{tpu_custom_call.1} parent=39 // pred_fallthru
          _
      $region40: #{tpu_custom_call.1} parent=5 // pred_fallthru
        _
    $region6: #{tpu_custom_call.1} parent=1 // loop_footer
      %s25 = sadd.s32 1, %s21
    $region7: #{tpu_custom_call.1} parent=1 // loop_footer_branch
      %20 = sbr.rel target = $region3
    $region8: #{tpu_custom_call.1} parent=1 // loop_exit
      _
    %1239 = vsyncpa [#allocation5], 1
    %s1240 = scalar_lea.sflag [#allocation5], 1
    %1241 = vsyncpa %s1240, 1

// kernel: tpu_custom_call.1
$region0: #{tpu_custom_call.1}
  #allocation0 [shape = 'u32[]', space=smem, size = 0x4, offset = 0x4, fixed_abs, tag = 'smem constant byte address 0x4 - core index']
  #allocation1 [shape = 'u32[72,128]{1,0:T(1,128)}', space=vmem, size = 0x9000, scoped, tag = 'internal scratch']
  #allocation2 [shape = 's32[1]{0}', space=sflag, size = 0x4, scoped, tag = 'scoped memory for tpu_custom_call.1']
  #allocation3 [shape = 'u8[512]{0}', space=smem, size = 0x200, scoped, tag = 'prefetched SMEM operand 0']
  %s0 = inlined_call_operand.vmem [shape: s32[9], index: 0, kind: input, shape index: {}]
  %s1 = inlined_call_operand.vmem [shape: s32[9,2,128], index: 1, kind: input, shape index: {}]
  %s2 = inlined_call_operand.vmem [shape: bf16[2,256,128], index: 2, kind: input, shape index: {}]
  %s3 = inlined_call_operand.vmem [shape: f32[3,256,1], index: 3, kind: input, shape index: {}]
  %s4 = inlined_call_operand.hbm [shape: f32[9,1,128], index: 4, kind: output, shape index: {}]
  %s5 = sld [smem:[#allocation0]]
  $region45: #{tpu_custom_call.1} parent=0
    _
  %s7 = ssub.s32 1, %s5
  %s8 = scalar_select 0, %s7, %s5
  %s10 = sshll.u32 %s0, 4
  %s11 = int_to_ptr.vmem [resolvable:$true] %s10
  %13 = dma.vmem_to_smem %s11, 16, [#allocation3], [#allocation2]
  %15 = dma.done [#allocation2], 16
  %16 = sfence
  $region1: #{tpu_custom_call.1} parent=0
    #allocation4 [shape = 'u8[1024]{0}', space=vmem, size = 0x400, scoped, tag = 'output window, operand 0']
    #allocation5 [shape = 's32[2]{0}', space=sflag, size = 0x8, scoped, tag = 'scoped memory for tpu_custom_call.1']
    %17 = vsyncpa [#allocation5], 0
    %s18 = scalar_lea.sflag [#allocation5], 1
    %19 = vsyncpa %s18, 0
    loop: start=0, step=1, limit=11
    $region2: #{tpu_custom_call.1} parent=1 // loop_pre_header
      _
    $region3: #{tpu_custom_call.1} parent=1 // loop_header
      %s21 = sphi 0, %s25
      %p22 = scmp.ge.s32.totalorder %s21, 11
      %s31 = sphi 0, %s33
      %s34 = sphi 0, %s31
      %s35 = sphi 0, %s34
      %s51 = sphi 0, %s35
      %s55 = sphi 0, %s55
      %s57 = sphi 0, %s55
      %s58 = sphi 0, %s57
      %s72 = sphi 0, %s58
      %s80 = sphi 0, %s82
      %s83 = sphi 0, %s80
      %s84 = sphi 0, %s83
      %s100 = sphi 0, %s84
      %s106 = sphi 0, %s108
      %s109 = sphi 0, %s106
      %s110 = sphi 0, %s109
      %s126 = sphi 0, %s110
    $region4: #{tpu_custom_call.1} parent=1 // loop_header_branch
      %24 = sbr.rel (%p22) target = $region8
    $region5: #{tpu_custom_call.1} parent=1 // loop_body
      %s26 = ssub.s32 %s21, 1
      %s27 = ssub.s32 %s21, 2
      %s28 = sadd.s32 %s21, 1
      %s29 = ssub.s32 %s21, %s28
      %p30 = scmp.eq.s32.totalorder %s29, 0
      %s32 = sadd.s32 %s31, 1
      %s33 = scalar_select %p30, %s31, %s32
      %p36 = pneg %p30
      %p37 = scmp.eq.s32.totalorder %s21, 8
      %p38 = por %p36, %p37
      %p39 = scmp.ne.s32.totalorder %s31, %s34
      %p40 = scmp.eq.s32.totalorder %s21, 0
      %p41 = por %p39, %p40
      %p42 = scmp.ne.s32.totalorder %s31, %s34
      %p43 = scmp.eq.s32.totalorder %s26, 8
      %p44 = por %p42, %p43
      %p45 = scmp.ne.s32.totalorder %s34, %s35
      %p46 = scmp.eq.s32.totalorder %s26, 0
      %p47 = por %p45, %p46
      %p48 = scmp.ne.s32.totalorder %s34, %s35
      %p49 = scmp.eq.s32.totalorder %s27, 8
      %p50 = por %p48, %p49
      %p52 = scmp.ne.s32.totalorder %s35, %s51
      %p53 = scmp.eq.s32.totalorder %s27, 0
      %p54 = por %p52, %p53
      %s56 = sadd.s32 %s55, 1
      %p59 = scmp.eq.s32.totalorder %s21, 8
      %p60 = scmp.ne.s32.totalorder %s55, %s57
      %p61 = scmp.eq.s32.totalorder %s21, 0
      %p62 = por %p60, %p61
      %p63 = scmp.ne.s32.totalorder %s55, %s57
      %p64 = scmp.eq.s32.totalorder %s26, 8
      %p65 = por %p63, %p64
      %p66 = scmp.ne.s32.totalorder %s57, %s58
      %p67 = scmp.eq.s32.totalorder %s26, 0
      %p68 = por %p66, %p67
      %p69 = scmp.ne.s32.totalorder %s57, %s58
      %p70 = scmp.eq.s32.totalorder %s27, 8
      %p71 = por %p69, %p70
      %p73 = scmp.ne.s32.totalorder %s58, %s72
      %p74 = scmp.eq.s32.totalorder %s27, 0
      %p75 = por %p73, %p74
      %s76 = sld [smem:[#allocation3 + %s21]]
      %s77 = sld [smem:[#allocation3 + %s28]]
      %s78 = ssub.s32 %s76, %s77
      %p79 = scmp.eq.s32.totalorder %s78, 0
      %s81 = sadd.s32 %s80, 1
      %s82 = scalar_select %p79, %s80, %s81
      %p85 = pneg %p79
      %p86 = scmp.eq.s32.totalorder %s21, 8
      %p87 = por %p85, %p86
      %p88 = scmp.ne.s32.totalorder %s80, %s83
      %p89 = scmp.eq.s32.totalorder %s21, 0
      %p90 = por %p88, %p89
      %p91 = scmp.ne.s32.totalorder %s80, %s83
      %p92 = scmp.eq.s32.totalorder %s26, 8
      %p93 = por %p91, %p92
      %p94 = scmp.ne.s32.totalorder %s83, %s84
      %p95 = scmp.eq.s32.totalorder %s26, 0
      %p96 = por %p94, %p95
      %p97 = scmp.ne.s32.totalorder %s83, %s84
      %p98 = scmp.eq.s32.totalorder %s27, 8
      %p99 = por %p97, %p98
      %p101 = scmp.ne.s32.totalorder %s84, %s100
      %p102 = scmp.eq.s32.totalorder %s27, 0
      %p103 = por %p101, %p102
      %s104 = ssub.s32 %s21, %s28
      %p105 = scmp.eq.s32.totalorder %s104, 0
      %s107 = sadd.s32 %s106, 1
      %s108 = scalar_select %p105, %s106, %s107
      %p111 = pneg %p105
      %p112 = scmp.eq.s32.totalorder %s21, 8
      %p113 = por %p111, %p112
      %p114 = scmp.ne.s32.totalorder %s106, %s109
      %p115 = scmp.eq.s32.totalorder %s21, 0
      %p116 = por %p114, %p115
      %p117 = scmp.ne.s32.totalorder %s106, %s109
      %p118 = scmp.eq.s32.totalorder %s26, 8
      %p119 = por %p117, %p118
      %p120 = scmp.ne.s32.totalorder %s109, %s110
      %p121 = scmp.eq.s32.totalorder %s26, 0
      %p122 = por %p120, %p121
      %p123 = scmp.ne.s32.totalorder %s109, %s110
      %p124 = scmp.eq.s32.totalorder %s27, 8
      %p125 = por %p123, %p124
      %p127 = scmp.ne.s32.totalorder %s110, %s126
      %p128 = scmp.eq.s32.totalorder %s27, 0
      %p129 = por %p127, %p128
      %p130 = scmp.le.s32.totalorder 1, %s21
      %p131 = scmp.lt.s32.totalorder %s21, 10
      %p132 = pnand %p130, %p131
      %p133 = pneg %p132
      // Predicated region
      $region9: #{tpu_custom_call.1} parent=5 // pred_check
        _
      $region10: #{tpu_custom_call.1} parent=5 // pred_check_branch
        %135 = sbr.rel (%p132) target = $region12
      $region11: #{tpu_custom_call.1} parent=5 // pred_region
        %s136 = ssub.s32 %s21, 1
        // Predicated region
        $region13: #{tpu_custom_call.1} parent=11 // pred_check
          %p137 = pneg %p68
        $region14: #{tpu_custom_call.1} parent=11 // pred_check_branch
          %139 = sbr.rel (%p137) target = $region16
        $region15: #{tpu_custom_call.1} parent=11 // pred_region
          _
        $region16: #{tpu_custom_call.1} parent=11 // pred_fallthru
          _
      $region12: #{tpu_custom_call.1} parent=5 // pred_fallthru
        _
      %p140 = scmp.lt.s32.totalorder %s21, 9
      // Predicated region
      $region17: #{tpu_custom_call.1} parent=5 // pred_check
        %p141 = pneg %p140
      $region18: #{tpu_custom_call.1} parent=5 // pred_check_branch
        %143 = sbr.rel (%p141) target = $region20
      $region19: #{tpu_custom_call.1} parent=5 // pred_region
        // Predicated region
        $region21: #{tpu_custom_call.1} parent=19 // pred_check
          %p144 = pneg %p41
        $region22: #{tpu_custom_call.1} parent=19 // pred_check_branch
          %146 = sbr.rel (%p144) target = $region24
        $region23: #{tpu_custom_call.1} parent=19 // pred_region
          %p147 = scmp.lt.s32.totalorder %s21, 8
          %s148 = scalar_select %p147, %s21, 8
          %s149 = smul.addr %s148, 2
          %s150 = scalar_lea.vmem %s1, %s149
        $region24: #{tpu_custom_call.1} parent=19 // pred_fallthru
          _
        // Predicated region
        $region25: #{tpu_custom_call.1} parent=19 // pred_check
          %p151 = pneg %p90
        $region26: #{tpu_custom_call.1} parent=19 // pred_check_branch
          %153 = sbr.rel (%p151) target = $region28
        $region27: #{tpu_custom_call.1} parent=19 // pred_region
          %s154 = sld [smem:[#allocation3 + %s21]]
          %p155 = scmp.lt.s32.totalorder %s154, 2
          %s156 = scalar_select %p155, %s154, 2
          %s157 = smul.addr %s156, 32
          %s158 = smul.addr %s157, 8
          %s159 = scalar_lea.vmem %s3, %s158
          %s160 = sld [smem:[#allocation3 + %s21]]
        $region28: #{tpu_custom_call.1} parent=19 // pred_fallthru
          _
      $region20: #{tpu_custom_call.1} parent=5 // pred_fallthru
        _
      %p161 = scmp.le.s32.totalorder 1, %s21
      %p162 = scmp.lt.s32.totalorder %s21, 10
      %p163 = pnand %p161, %p162
      %p164 = pneg %p163
      // Predicated region
      $region29: #{tpu_custom_call.1} parent=5 // pred_check
        _
      $region30: #{tpu_custom_call.1} parent=5 // pred_check_branch
        %166 = sbr.rel (%p163) target = $region32
      $region31: #{tpu_custom_call.1} parent=5 // pred_region
        %s167 = ssub.s32 %s21, 1
        %p168 = scmp.lt.s32.totalorder %s26, 8
        %s169 = scalar_select %p168, %s26, 8
        %s170 = smul.addr %s169, 2
        %s171 = scalar_lea.vmem %s1, %s170
        %p172 = pneg %p47
        %p173 = pneg %p44
        %p174 = pneg %p68
        %p175 = pneg %p65
        %s176 = sld [smem:[#allocation3 + %s26]]
        %p177 = scmp.lt.s32.totalorder %s176, 2
        %s178 = scalar_select %p177, %s176, 2
        %s179 = smul.addr %s178, 32
        %s180 = smul.addr %s179, 8
        %s181 = scalar_lea.vmem %s3, %s180
        %p182 = pneg %p96
        %p183 = pneg %p93
        %p184 = pneg %p122
        %p185 = pneg %p119
        %s186 = sand.u32 %s109, 1
        %s187 = scalar_lea.sflag [#allocation5], %s186
        %s188 = sand.u32 %s109, 1
        %s189 = scalar_lea.vmem [#allocation4], %s188
        %p190 = scmp.lt.s32.totalorder %s26, 8
        %s191 = scalar_select %p190, %s26, 8
        %s192 = smul.addr %s191, 2
        %s193 = scalar_lea.vmem %s1, %s192
        %s194 = sld [smem:[#allocation3 + %s26]]
        %p195 = scmp.lt.s32.totalorder %s194, 2
        %s196 = scalar_select %p195, %s194, 2
        %s197 = smul.addr %s196, 32
        %s198 = smul.addr %s197, 8
        %s199 = scalar_lea.vmem %s3, %s198
        %s200 = sld [smem:[#allocation3 + %s26]]
        %v201 = vld [vmem:[%s193] sm:$0x3]
        %v202 = vlaneseq
        %v203 = vshrl.u32 %v202, 7
        %v204 = vadd.s32 %v203, 8
        %v205 = vadd.s32 %v203, 16
        %v206 = vadd.s32 %v203, 24
        %v207 = vadd.s32 %v203, 32
        %v208 = vadd.s32 %v203, 40
        %v209 = vadd.s32 %v203, 48
        %v210 = vadd.s32 %v203, 56
        %v211 = vadd.s32 %v203, 64
        %v212 = vadd.s32 %v203, 72
        %v213 = vadd.s32 %v203, 80
        %v214 = vadd.s32 %v203, 88
        %v215 = vadd.s32 %v203, 96
        %v216 = vadd.s32 %v203, 104
        %v217 = vadd.s32 %v203, 112
        %v218 = vadd.s32 %v203, 120
        %v219 = vld [vmem:[%s2] sm:$0xf]
        %v220 = vld [vmem:[%s2 + $0x4] sm:$0xf]
        %v221 = vld [vmem:[%s2 + $0x8] sm:$0xf]
        %v222 = vld [vmem:[%s2 + $0xc] sm:$0xf]
        %v223 = vld [vmem:[%s2 + $0x10] sm:$0xf]
        %v224 = vld [vmem:[%s2 + $0x14] sm:$0xf]
        %v225 = vld [vmem:[%s2 + $0x18] sm:$0xf]
        %v226 = vld [vmem:[%s2 + $0x1c] sm:$0xf]
        %v227 = vld [vmem:[%s2 + $0x20] sm:$0xf]
        %v228 = vld [vmem:[%s2 + $0x24] sm:$0xf]
        %v229 = vld [vmem:[%s2 + $0x28] sm:$0xf]
        %v230 = vld [vmem:[%s2 + $0x2c] sm:$0xf]
        %v231 = vld [vmem:[%s2 + $0x30] sm:$0xf]
        %v232 = vld [vmem:[%s2 + $0x34] sm:$0xf]
        %v233 = vld [vmem:[%s2 + $0x38] sm:$0xf]
        %v234 = vld [vmem:[%s2 + $0x3c] sm:$0xf]
        %v235 = vld [vmem:[%s2 + $0x40] sm:$0xf]
        %v236 = vld [vmem:[%s2 + $0x44] sm:$0xf]
        %v237 = vld [vmem:[%s2 + $0x48] sm:$0xf]
        %v238 = vld [vmem:[%s2 + $0x4c] sm:$0xf]
        %v239 = vld [vmem:[%s2 + $0x50] sm:$0xf]
        %v240 = vld [vmem:[%s2 + $0x54] sm:$0xf]
        %v241 = vld [vmem:[%s2 + $0x58] sm:$0xf]
        %v242 = vld [vmem:[%s2 + $0x5c] sm:$0xf]
        %v243 = vld [vmem:[%s2 + $0x60] sm:$0xf]
        %v244 = vld [vmem:[%s2 + $0x64] sm:$0xf]
        %v245 = vld [vmem:[%s2 + $0x68] sm:$0xf]
        %v246 = vld [vmem:[%s2 + $0x6c] sm:$0xf]
        %v247 = vld [vmem:[%s2 + $0x70] sm:$0xf]
        %v248 = vld [vmem:[%s2 + $0x74] sm:$0xf]
        %v249 = vld [vmem:[%s2 + $0x78] sm:$0xf]
        %v250 = vld [vmem:[%s2 + $0x7c] sm:$0xf]
        %s251 = scalar_lea.vmem %s2, 128
        %v252 = vld [vmem:[%s251] sm:$0xf]
        %v253 = vld [vmem:[%s251 + $0x4] sm:$0xf]
        %v254 = vld [vmem:[%s251 + $0x8] sm:$0xf]
        %v255 = vld [vmem:[%s251 + $0xc] sm:$0xf]
        %v256 = vld [vmem:[%s251 + $0x10] sm:$0xf]
        %v257 = vld [vmem:[%s251 + $0x14] sm:$0xf]
        %v258 = vld [vmem:[%s251 + $0x18] sm:$0xf]
        %v259 = vld [vmem:[%s251 + $0x1c] sm:$0xf]
        %v260 = vld [vmem:[%s251 + $0x20] sm:$0xf]
        %v261 = vld [vmem:[%s251 + $0x24] sm:$0xf]
        %v262 = vld [vmem:[%s251 + $0x28] sm:$0xf]
        %v263 = vld [vmem:[%s251 + $0x2c] sm:$0xf]
        %v264 = vld [vmem:[%s251 + $0x30] sm:$0xf]
        %v265 = vld [vmem:[%s251 + $0x34] sm:$0xf]
        %v266 = vld [vmem:[%s251 + $0x38] sm:$0xf]
        %v267 = vld [vmem:[%s251 + $0x3c] sm:$0xf]
        %v268 = vld [vmem:[%s251 + $0x40] sm:$0xf]
        %v269 = vld [vmem:[%s251 + $0x44] sm:$0xf]
        %v270 = vld [vmem:[%s251 + $0x48] sm:$0xf]
        %v271 = vld [vmem:[%s251 + $0x4c] sm:$0xf]
        %v272 = vld [vmem:[%s251 + $0x50] sm:$0xf]
        %v273 = vld [vmem:[%s251 + $0x54] sm:$0xf]
        %v274 = vld [vmem:[%s251 + $0x58] sm:$0xf]
        %v275 = vld [vmem:[%s251 + $0x5c] sm:$0xf]
        %v276 = vld [vmem:[%s251 + $0x60] sm:$0xf]
        %v277 = vld [vmem:[%s251 + $0x64] sm:$0xf]
        %v278 = vld [vmem:[%s251 + $0x68] sm:$0xf]
        %v279 = vld [vmem:[%s251 + $0x6c] sm:$0xf]
        %v280 = vld [vmem:[%s251 + $0x70] sm:$0xf]
        %v281 = vld [vmem:[%s251 + $0x74] sm:$0xf]
        %v282 = vld [vmem:[%s251 + $0x78] sm:$0xf]
        %v283 = vld [vmem:[%s251 + $0x7c] sm:$0xf]
        %v284 = vperm.slane %v201, 0
        %vm285 = vcmp.eq.s32.totalorder %v203, %v284
        %vm286 = vcmp.eq.s32.totalorder %v204, %v284
        %vm287 = vcmp.eq.s32.totalorder %v205, %v284
        %vm288 = vcmp.eq.s32.totalorder %v206, %v284
        %vm289 = vcmp.eq.s32.totalorder %v207, %v284
        %vm290 = vcmp.eq.s32.totalorder %v208, %v284
        %vm291 = vcmp.eq.s32.totalorder %v209, %v284
        %vm292 = vcmp.eq.s32.totalorder %v210, %v284
        %vm293 = vcmp.eq.s32.totalorder %v211, %v284
        %vm294 = vcmp.eq.s32.totalorder %v212, %v284
        %vm295 = vcmp.eq.s32.totalorder %v213, %v284
        %vm296 = vcmp.eq.s32.totalorder %v214, %v284
        %vm297 = vcmp.eq.s32.totalorder %v215, %v284
        %vm298 = vcmp.eq.s32.totalorder %v216, %v284
        %vm299 = vcmp.eq.s32.totalorder %v217, %v284
        %vm300 = vcmp.eq.s32.totalorder %v218, %v284
        %v301 = vsel %vm285, 1.0, 0.0
        %v302 = vsel %vm286, 1.0, 0.0
        %v303 = vsel %vm287, 1.0, 0.0
        %v304 = vsel %vm288, 1.0, 0.0
        %v305 = vsel %vm289, 1.0, 0.0
        %v306 = vsel %vm290, 1.0, 0.0
        %v307 = vsel %vm291, 1.0, 0.0
        %v308 = vsel %vm292, 1.0, 0.0
        %v309 = vsel %vm293, 1.0, 0.0
        %v310 = vsel %vm294, 1.0, 0.0
        %v311 = vsel %vm295, 1.0, 0.0
        %v312 = vsel %vm296, 1.0, 0.0
        %v313 = vsel %vm297, 1.0, 0.0
        %v314 = vsel %vm298, 1.0, 0.0
        %v315 = vsel %vm299, 1.0, 0.0
        %v316 = vsel %vm300, 1.0, 0.0
        %v317 = vpack.c.bf16 %v302, %v301
        %v318 = vpack.c.bf16 %v304, %v303
        %v319 = vpack.c.bf16 %v306, %v305
        %v320 = vpack.c.bf16 %v308, %v307
        %v321 = vpack.c.bf16 %v310, %v309
        %v322 = vpack.c.bf16 %v312, %v311
        %v323 = vpack.c.bf16 %v314, %v313
        %v324 = vpack.c.bf16 %v316, %v315
        %v357 = vunpack.c.l.b16 %v252
        %v358 = vunpack.c.l.b16 %v253
        %v359 = vunpack.c.l.b16 %v254
        %v360 = vunpack.c.l.b16 %v255
        %v361 = vunpack.c.l.b16 %v256
        %v362 = vunpack.c.l.b16 %v257
        %v363 = vunpack.c.l.b16 %v258
        %v364 = vunpack.c.l.b16 %v259
        %v365 = vunpack.c.l.b16 %v260
        %v366 = vunpack.c.l.b16 %v261
        %v367 = vunpack.c.l.b16 %v262
        %v368 = vunpack.c.l.b16 %v263
        %v369 = vunpack.c.l.b16 %v264
        %v370 = vunpack.c.l.b16 %v265
        %v371 = vunpack.c.l.b16 %v266
        %v372 = vunpack.c.l.b16 %v267
        %v373 = vunpack.c.l.b16 %v268
        %v374 = vunpack.c.l.b16 %v269
        %v375 = vunpack.c.l.b16 %v270
        %v376 = vunpack.c.l.b16 %v271
        %v377 = vunpack.c.l.b16 %v272
        %v378 = vunpack.c.l.b16 %v273
        %v379 = vunpack.c.l.b16 %v274
        %v380 = vunpack.c.l.b16 %v275
        %v381 = vunpack.c.l.b16 %v276
        %v382 = vunpack.c.l.b16 %v277
        %v383 = vunpack.c.l.b16 %v278
        %v384 = vunpack.c.l.b16 %v279
        %v385 = vunpack.c.l.b16 %v280
        %v386 = vunpack.c.l.b16 %v281
        %v387 = vunpack.c.l.b16 %v282
        %v388 = vunpack.c.l.b16 %v283
        %v389 = vpack.c.b16 %v358, %v357
        %v390 = vpack.c.b16 %v360, %v359
        %v391 = vpack.c.b16 %v362, %v361
        %v392 = vpack.c.b16 %v364, %v363
        %v393 = vpack.c.b16 %v366, %v365
        %v394 = vpack.c.b16 %v368, %v367
        %v395 = vpack.c.b16 %v370, %v369
        %v396 = vpack.c.b16 %v372, %v371
        %v397 = vpack.c.b16 %v374, %v373
        %v398 = vpack.c.b16 %v376, %v375
        %v399 = vpack.c.b16 %v378, %v377
        %v400 = vpack.c.b16 %v380, %v379
        %v401 = vpack.c.b16 %v382, %v381
        %v402 = vpack.c.b16 %v384, %v383
        %v403 = vpack.c.b16 %v386, %v385
        %v404 = vpack.c.b16 %v388, %v387
        %421 = vmatpush.bf16.msra.mxu0 %v324
        %422 = vmatpush.bf16.msra.mxu0 %v323
        %423 = vmatpush.bf16.msra.mxu0 %v322
        %424 = vmatpush.bf16.msra.mxu0 %v321
        %425 = vmatpush.bf16.msra.mxu0 %v320
        %426 = vmatpush.bf16.msra.mxu0 %v319
        %427 = vmatpush.bf16.msra.mxu0 %v318
        %428 = vmatpush.bf16.msra.mxu0 %v317
        %429 = vmatmul.bf16.gmra.mxu0 %v389
        %v430 = vpop.f32.mrf.mxu0
        %v431 = vadd.f32 0.0, %v430
        %v432 = vpop.f32.mrf.mxu0
        %v433 = vadd.f32 0.0, %v432
        %434 = vmatmul.bf16.gmra.mxu0 %v390
        %v435 = vpop.f32.mrf.mxu0
        %v436 = vadd.f32 0.0, %v435
        %v437 = vpop.f32.mrf.mxu0
        %v438 = vadd.f32 0.0, %v437
        %439 = vmatmul.bf16.gmra.mxu0 %v391
        %v440 = vpop.f32.mrf.mxu0
        %v441 = vadd.f32 0.0, %v440
        %v442 = vpop.f32.mrf.mxu0
        %v443 = vadd.f32 0.0, %v442
        %444 = vmatmul.bf16.gmra.mxu0 %v392
        %v445 = vpop.f32.mrf.mxu0
        %v446 = vadd.f32 0.0, %v445
        %v447 = vpop.f32.mrf.mxu0
        %v448 = vadd.f32 0.0, %v447
        %449 = vmatmul.bf16.gmra.mxu0 %v393
        %v450 = vpop.f32.mrf.mxu0
        %v451 = vadd.f32 0.0, %v450
        %v452 = vpop.f32.mrf.mxu0
        %v453 = vadd.f32 0.0, %v452
        %454 = vmatmul.bf16.gmra.mxu0 %v394
        %v455 = vpop.f32.mrf.mxu0
        %v456 = vadd.f32 0.0, %v455
        %v457 = vpop.f32.mrf.mxu0
        %v458 = vadd.f32 0.0, %v457
        %459 = vmatmul.bf16.gmra.mxu0 %v395
        %v460 = vpop.f32.mrf.mxu0
        %v461 = vadd.f32 0.0, %v460
        %v462 = vpop.f32.mrf.mxu0
        %v463 = vadd.f32 0.0, %v462
        %464 = vmatmul.bf16.gmra.mxu0 %v396
        %v465 = vpop.f32.mrf.mxu0
        %v466 = vadd.f32 0.0, %v465
        %v467 = vpop.f32.mrf.mxu0
        %v468 = vadd.f32 0.0, %v467
        %469 = vmatmul.bf16.gmra.mxu0 %v397
        %v470 = vpop.f32.mrf.mxu0
        %v471 = vadd.f32 0.0, %v470
        %v472 = vpop.f32.mrf.mxu0
        %v473 = vadd.f32 0.0, %v472
        %474 = vmatmul.bf16.gmra.mxu0 %v398
        %v475 = vpop.f32.mrf.mxu0
        %v476 = vadd.f32 0.0, %v475
        %v477 = vpop.f32.mrf.mxu0
        %v478 = vadd.f32 0.0, %v477
        %479 = vmatmul.bf16.gmra.mxu0 %v399
        %v480 = vpop.f32.mrf.mxu0
        %v481 = vadd.f32 0.0, %v480
        %v482 = vpop.f32.mrf.mxu0
        %v483 = vadd.f32 0.0, %v482
        %484 = vmatmul.bf16.gmra.mxu0 %v400
        %v485 = vpop.f32.mrf.mxu0
        %v486 = vadd.f32 0.0, %v485
        %v487 = vpop.f32.mrf.mxu0
        %v488 = vadd.f32 0.0, %v487
        %489 = vmatmul.bf16.gmra.mxu0 %v401
        %v490 = vpop.f32.mrf.mxu0
        %v491 = vadd.f32 0.0, %v490
        %v492 = vpop.f32.mrf.mxu0
        %v493 = vadd.f32 0.0, %v492
        %494 = vmatmul.bf16.gmra.mxu0 %v402
        %v495 = vpop.f32.mrf.mxu0
        %v496 = vadd.f32 0.0, %v495
        %v497 = vpop.f32.mrf.mxu0
        %v498 = vadd.f32 0.0, %v497
        %499 = vmatmul.bf16.gmra.mxu0 %v403
        %v500 = vpop.f32.mrf.mxu0
        %v501 = vadd.f32 0.0, %v500
        %v502 = vpop.f32.mrf.mxu0
        %v503 = vadd.f32 0.0, %v502
        %504 = vmatmul.bf16.gmra.mxu0 %v404
        %v505 = vpop.f32.mrf.mxu0
        %v506 = vadd.f32 0.0, %v505
        %v507 = vpop.f32.mrf.mxu0
        %v508 = vadd.f32 0.0, %v507
        %509 = vdwg.mxu0
        %v542 = vunpack.c.l.b16 %v219
        %v543 = vunpack.c.l.b16 %v220
        %v544 = vunpack.c.l.b16 %v221
        %v545 = vunpack.c.l.b16 %v222
        %v546 = vunpack.c.l.b16 %v223
        %v547 = vunpack.c.l.b16 %v224
        %v548 = vunpack.c.l.b16 %v225
        %v549 = vunpack.c.l.b16 %v226
        %v550 = vunpack.c.l.b16 %v227
        %v551 = vunpack.c.l.b16 %v228
        %v552 = vunpack.c.l.b16 %v229
        %v553 = vunpack.c.l.b16 %v230
        %v554 = vunpack.c.l.b16 %v231
        %v555 = vunpack.c.l.b16 %v232
        %v556 = vunpack.c.l.b16 %v233
        %v557 = vunpack.c.l.b16 %v234
        %v558 = vunpack.c.l.b16 %v235
        %v559 = vunpack.c.l.b16 %v236
        %v560 = vunpack.c.l.b16 %v237
        %v561 = vunpack.c.l.b16 %v238
        %v562 = vunpack.c.l.b16 %v239
        %v563 = vunpack.c.l.b16 %v240
        %v564 = vunpack.c.l.b16 %v241
        %v565 = vunpack.c.l.b16 %v242
        %v566 = vunpack.c.l.b16 %v243
        %v567 = vunpack.c.l.b16 %v244
        %v568 = vunpack.c.l.b16 %v245
        %v569 = vunpack.c.l.b16 %v246
        %v570 = vunpack.c.l.b16 %v247
        %v571 = vunpack.c.l.b16 %v248
        %v572 = vunpack.c.l.b16 %v249
        %v573 = vunpack.c.l.b16 %v250
        %v574 = vpack.c.b16 %v543, %v542
        %v575 = vpack.c.b16 %v545, %v544
        %v576 = vpack.c.b16 %v547, %v546
        %v577 = vpack.c.b16 %v549, %v548
        %v578 = vpack.c.b16 %v551, %v550
        %v579 = vpack.c.b16 %v553, %v552
        %v580 = vpack.c.b16 %v555, %v554
        %v581 = vpack.c.b16 %v557, %v556
        %v582 = vpack.c.b16 %v559, %v558
        %v583 = vpack.c.b16 %v561, %v560
        %v584 = vpack.c.b16 %v563, %v562
        %v585 = vpack.c.b16 %v565, %v564
        %v586 = vpack.c.b16 %v567, %v566
        %v587 = vpack.c.b16 %v569, %v568
        %v588 = vpack.c.b16 %v571, %v570
        %v589 = vpack.c.b16 %v573, %v572
        %606 = vmatpush.bf16.msra.mxu0 %v324
        %607 = vmatpush.bf16.msra.mxu0 %v323
        %608 = vmatpush.bf16.msra.mxu0 %v322
        %609 = vmatpush.bf16.msra.mxu0 %v321
        %610 = vmatpush.bf16.msra.mxu0 %v320
        %611 = vmatpush.bf16.msra.mxu0 %v319
        %612 = vmatpush.bf16.msra.mxu0 %v318
        %613 = vmatpush.bf16.msra.mxu0 %v317
        %614 = vmatmul.bf16.gmra.mxu0 %v574
        %v615 = vpop.f32.mrf.mxu0
        %v616 = vadd.f32 %v431, %v615
        %v617 = vpop.f32.mrf.mxu0
        %v618 = vadd.f32 %v433, %v617
        %619 = vmatmul.bf16.gmra.mxu0 %v575
        %v620 = vpop.f32.mrf.mxu0
        %v621 = vadd.f32 %v436, %v620
        %v622 = vpop.f32.mrf.mxu0
        %v623 = vadd.f32 %v438, %v622
        %624 = vmatmul.bf16.gmra.mxu0 %v576
        %v625 = vpop.f32.mrf.mxu0
        %v626 = vadd.f32 %v441, %v625
        %v627 = vpop.f32.mrf.mxu0
        %v628 = vadd.f32 %v443, %v627
        %629 = vmatmul.bf16.gmra.mxu0 %v577
        %v630 = vpop.f32.mrf.mxu0
        %v631 = vadd.f32 %v446, %v630
        %v632 = vpop.f32.mrf.mxu0
        %v633 = vadd.f32 %v448, %v632
        %634 = vmatmul.bf16.gmra.mxu0 %v578
        %v635 = vpop.f32.mrf.mxu0
        %v636 = vadd.f32 %v451, %v635
        %v637 = vpop.f32.mrf.mxu0
        %v638 = vadd.f32 %v453, %v637
        %639 = vmatmul.bf16.gmra.mxu0 %v579
        %v640 = vpop.f32.mrf.mxu0
        %v641 = vadd.f32 %v456, %v640
        %v642 = vpop.f32.mrf.mxu0
        %v643 = vadd.f32 %v458, %v642
        %644 = vmatmul.bf16.gmra.mxu0 %v580
        %v645 = vpop.f32.mrf.mxu0
        %v646 = vadd.f32 %v461, %v645
        %v647 = vpop.f32.mrf.mxu0
        %v648 = vadd.f32 %v463, %v647
        %649 = vmatmul.bf16.gmra.mxu0 %v581
        %v650 = vpop.f32.mrf.mxu0
        %v651 = vadd.f32 %v466, %v650
        %v652 = vpop.f32.mrf.mxu0
        %v653 = vadd.f32 %v468, %v652
        %654 = vmatmul.bf16.gmra.mxu0 %v582
        %v655 = vpop.f32.mrf.mxu0
        %v656 = vadd.f32 %v471, %v655
        %v657 = vpop.f32.mrf.mxu0
        %v658 = vadd.f32 %v473, %v657
        %659 = vmatmul.bf16.gmra.mxu0 %v583
        %v660 = vpop.f32.mrf.mxu0
        %v661 = vadd.f32 %v476, %v660
        %v662 = vpop.f32.mrf.mxu0
        %v663 = vadd.f32 %v478, %v662
        %664 = vmatmul.bf16.gmra.mxu0 %v584
        %v665 = vpop.f32.mrf.mxu0
        %v666 = vadd.f32 %v481, %v665
        %v667 = vpop.f32.mrf.mxu0
        %v668 = vadd.f32 %v483, %v667
        %669 = vmatmul.bf16.gmra.mxu0 %v585
        %v670 = vpop.f32.mrf.mxu0
        %v671 = vadd.f32 %v486, %v670
        %v672 = vpop.f32.mrf.mxu0
        %v673 = vadd.f32 %v488, %v672
        %674 = vmatmul.bf16.gmra.mxu0 %v586
        %v675 = vpop.f32.mrf.mxu0
        %v676 = vadd.f32 %v491, %v675
        %v677 = vpop.f32.mrf.mxu0
        %v678 = vadd.f32 %v493, %v677
        %679 = vmatmul.bf16.gmra.mxu0 %v587
        %v680 = vpop.f32.mrf.mxu0
        %v681 = vadd.f32 %v496, %v680
        %v682 = vpop.f32.mrf.mxu0
        %v683 = vadd.f32 %v498, %v682
        %684 = vmatmul.bf16.gmra.mxu0 %v588
        %v685 = vpop.f32.mrf.mxu0
        %v686 = vadd.f32 %v501, %v685
        %v687 = vpop.f32.mrf.mxu0
        %v688 = vadd.f32 %v503, %v687
        %689 = vmatmul.bf16.gmra.mxu0 %v589
        %v690 = vpop.f32.mrf.mxu0
        %v691 = vadd.f32 %v506, %v690
        %v692 = vpop.f32.mrf.mxu0
        %v693 = vadd.f32 %v508, %v692
        %694 = vdwg.mxu0
        %v695 = vperm.slane %v201, 1
        %vm696 = vcmp.eq.s32.totalorder %v203, %v695
        %vm697 = vcmp.eq.s32.totalorder %v204, %v695
        %vm698 = vcmp.eq.s32.totalorder %v205, %v695
        %vm699 = vcmp.eq.s32.totalorder %v206, %v695
        %vm700 = vcmp.eq.s32.totalorder %v207, %v695
        %vm701 = vcmp.eq.s32.totalorder %v208, %v695
        %vm702 = vcmp.eq.s32.totalorder %v209, %v695
        %vm703 = vcmp.eq.s32.totalorder %v210, %v695
        %vm704 = vcmp.eq.s32.totalorder %v211, %v695
        %vm705 = vcmp.eq.s32.totalorder %v212, %v695
        %vm706 = vcmp.eq.s32.totalorder %v213, %v695
        %vm707 = vcmp.eq.s32.totalorder %v214, %v695
        %vm708 = vcmp.eq.s32.totalorder %v215, %v695
        %vm709 = vcmp.eq.s32.totalorder %v216, %v695
        %vm710 = vcmp.eq.s32.totalorder %v217, %v695
        %vm711 = vcmp.eq.s32.totalorder %v218, %v695
        %v712 = vsel %vm696, 1.0, 0.0
        %v713 = vsel %vm697, 1.0, 0.0
        %v714 = vsel %vm698, 1.0, 0.0
        %v715 = vsel %vm699, 1.0, 0.0
        %v716 = vsel %vm700, 1.0, 0.0
        %v717 = vsel %vm701, 1.0, 0.0
        %v718 = vsel %vm702, 1.0, 0.0
        %v719 = vsel %vm703, 1.0, 0.0
        %v720 = vsel %vm704, 1.0, 0.0
        %v721 = vsel %vm705, 1.0, 0.0
        %v722 = vsel %vm706, 1.0, 0.0
        %v723 = vsel %vm707, 1.0, 0.0
        %v724 = vsel %vm708, 1.0, 0.0
        %v725 = vsel %vm709, 1.0, 0.0
        %v726 = vsel %vm710, 1.0, 0.0
        %v727 = vsel %vm711, 1.0, 0.0
        %v728 = vpack.c.bf16 %v713, %v712
        %v729 = vpack.c.bf16 %v715, %v714
        %v730 = vpack.c.bf16 %v717, %v716
        %v731 = vpack.c.bf16 %v719, %v718
        %v732 = vpack.c.bf16 %v721, %v720
        %v733 = vpack.c.bf16 %v723, %v722
        %v734 = vpack.c.bf16 %v725, %v724
        %v735 = vpack.c.bf16 %v727, %v726
        %736 = vmatpush.bf16.msra.mxu0 %v735
        %737 = vmatpush.bf16.msra.mxu0 %v734
        %738 = vmatpush.bf16.msra.mxu0 %v733
        %739 = vmatpush.bf16.msra.mxu0 %v732
        %740 = vmatpush.bf16.msra.mxu0 %v731
        %741 = vmatpush.bf16.msra.mxu0 %v730
        %742 = vmatpush.bf16.msra.mxu0 %v729
        %743 = vmatpush.bf16.msra.mxu0 %v728
        %744 = vmatmul.bf16.gmra.mxu0 %v389
        %v745 = vpop.f32.mrf.mxu0
        %v746 = vadd.f32 0.0, %v745
        %v747 = vpop.f32.mrf.mxu0
        %v748 = vadd.f32 0.0, %v747
        %749 = vmatmul.bf16.gmra.mxu0 %v390
        %v750 = vpop.f32.mrf.mxu0
        %v751 = vadd.f32 0.0, %v750
        %v752 = vpop.f32.mrf.mxu0
        %v753 = vadd.f32 0.0, %v752
        %754 = vmatmul.bf16.gmra.mxu0 %v391
        %v755 = vpop.f32.mrf.mxu0
        %v756 = vadd.f32 0.0, %v755
        %v757 = vpop.f32.mrf.mxu0
        %v758 = vadd.f32 0.0, %v757
        %759 = vmatmul.bf16.gmra.mxu0 %v392
        %v760 = vpop.f32.mrf.mxu0
        %v761 = vadd.f32 0.0, %v760
        %v762 = vpop.f32.mrf.mxu0
        %v763 = vadd.f32 0.0, %v762
        %764 = vmatmul.bf16.gmra.mxu0 %v393
        %v765 = vpop.f32.mrf.mxu0
        %v766 = vadd.f32 0.0, %v765
        %v767 = vpop.f32.mrf.mxu0
        %v768 = vadd.f32 0.0, %v767
        %769 = vmatmul.bf16.gmra.mxu0 %v394
        %v770 = vpop.f32.mrf.mxu0
        %v771 = vadd.f32 0.0, %v770
        %v772 = vpop.f32.mrf.mxu0
        %v773 = vadd.f32 0.0, %v772
        %774 = vmatmul.bf16.gmra.mxu0 %v395
        %v775 = vpop.f32.mrf.mxu0
        %v776 = vadd.f32 0.0, %v775
        %v777 = vpop.f32.mrf.mxu0
        %v778 = vadd.f32 0.0, %v777
        %779 = vmatmul.bf16.gmra.mxu0 %v396
        %v780 = vpop.f32.mrf.mxu0
        %v781 = vadd.f32 0.0, %v780
        %v782 = vpop.f32.mrf.mxu0
        %v783 = vadd.f32 0.0, %v782
        %784 = vmatmul.bf16.gmra.mxu0 %v397
        %v785 = vpop.f32.mrf.mxu0
        %v786 = vadd.f32 0.0, %v785
        %v787 = vpop.f32.mrf.mxu0
        %v788 = vadd.f32 0.0, %v787
        %789 = vmatmul.bf16.gmra.mxu0 %v398
        %v790 = vpop.f32.mrf.mxu0
        %v791 = vadd.f32 0.0, %v790
        %v792 = vpop.f32.mrf.mxu0
        %v793 = vadd.f32 0.0, %v792
        %794 = vmatmul.bf16.gmra.mxu0 %v399
        %v795 = vpop.f32.mrf.mxu0
        %v796 = vadd.f32 0.0, %v795
        %v797 = vpop.f32.mrf.mxu0
        %v798 = vadd.f32 0.0, %v797
        %799 = vmatmul.bf16.gmra.mxu0 %v400
        %v800 = vpop.f32.mrf.mxu0
        %v801 = vadd.f32 0.0, %v800
        %v802 = vpop.f32.mrf.mxu0
        %v803 = vadd.f32 0.0, %v802
        %804 = vmatmul.bf16.gmra.mxu0 %v401
        %v805 = vpop.f32.mrf.mxu0
        %v806 = vadd.f32 0.0, %v805
        %v807 = vpop.f32.mrf.mxu0
        %v808 = vadd.f32 0.0, %v807
        %809 = vmatmul.bf16.gmra.mxu0 %v402
        %v810 = vpop.f32.mrf.mxu0
        %v811 = vadd.f32 0.0, %v810
        %v812 = vpop.f32.mrf.mxu0
        %v813 = vadd.f32 0.0, %v812
        %814 = vmatmul.bf16.gmra.mxu0 %v403
        %v815 = vpop.f32.mrf.mxu0
        %v816 = vadd.f32 0.0, %v815
        %v817 = vpop.f32.mrf.mxu0
        %v818 = vadd.f32 0.0, %v817
        %819 = vmatmul.bf16.gmra.mxu0 %v404
        %v820 = vpop.f32.mrf.mxu0
        %v821 = vadd.f32 0.0, %v820
        %v822 = vpop.f32.mrf.mxu0
        %v823 = vadd.f32 0.0, %v822
        %824 = vdwg.mxu0
        %825 = vmatpush.bf16.msra.mxu0 %v735
        %826 = vmatpush.bf16.msra.mxu0 %v734
        %827 = vmatpush.bf16.msra.mxu0 %v733
        %828 = vmatpush.bf16.msra.mxu0 %v732
        %829 = vmatpush.bf16.msra.mxu0 %v731
        %830 = vmatpush.bf16.msra.mxu0 %v730
        %831 = vmatpush.bf16.msra.mxu0 %v729
        %832 = vmatpush.bf16.msra.mxu0 %v728
        %833 = vmatmul.bf16.gmra.mxu0 %v574
        %v834 = vpop.f32.mrf.mxu0
        %v835 = vadd.f32 %v746, %v834
        %v836 = vpop.f32.mrf.mxu0
        %v837 = vadd.f32 %v748, %v836
        %838 = vmatmul.bf16.gmra.mxu0 %v575
        %v839 = vpop.f32.mrf.mxu0
        %v840 = vadd.f32 %v751, %v839
        %v841 = vpop.f32.mrf.mxu0
        %v842 = vadd.f32 %v753, %v841
        %843 = vmatmul.bf16.gmra.mxu0 %v576
        %v844 = vpop.f32.mrf.mxu0
        %v845 = vadd.f32 %v756, %v844
        %v846 = vpop.f32.mrf.mxu0
        %v847 = vadd.f32 %v758, %v846
        %848 = vmatmul.bf16.gmra.mxu0 %v577
        %v849 = vpop.f32.mrf.mxu0
        %v850 = vadd.f32 %v761, %v849
        %v851 = vpop.f32.mrf.mxu0
        %v852 = vadd.f32 %v763, %v851
        %853 = vmatmul.bf16.gmra.mxu0 %v578
        %v854 = vpop.f32.mrf.mxu0
        %v855 = vadd.f32 %v766, %v854
        %v856 = vpop.f32.mrf.mxu0
        %v857 = vadd.f32 %v768, %v856
        %858 = vmatmul.bf16.gmra.mxu0 %v579
        %v859 = vpop.f32.mrf.mxu0
        %v860 = vadd.f32 %v771, %v859
        %v861 = vpop.f32.mrf.mxu0
        %v862 = vadd.f32 %v773, %v861
        %863 = vmatmul.bf16.gmra.mxu0 %v580
        %v864 = vpop.f32.mrf.mxu0
        %v865 = vadd.f32 %v776, %v864
        %v866 = vpop.f32.mrf.mxu0
        %v867 = vadd.f32 %v778, %v866
        %868 = vmatmul.bf16.gmra.mxu0 %v581
        %v869 = vpop.f32.mrf.mxu0
        %v870 = vadd.f32 %v781, %v869
        %v871 = vpop.f32.mrf.mxu0
        %v872 = vadd.f32 %v783, %v871
        %873 = vmatmul.bf16.gmra.mxu0 %v582
        %v874 = vpop.f32.mrf.mxu0
        %v875 = vadd.f32 %v786, %v874
        %v876 = vpop.f32.mrf.mxu0
        %v877 = vadd.f32 %v788, %v876
        %878 = vmatmul.bf16.gmra.mxu0 %v583
        %v879 = vpop.f32.mrf.mxu0
        %v880 = vadd.f32 %v791, %v879
        %v881 = vpop.f32.mrf.mxu0
        %v882 = vadd.f32 %v793, %v881
        %883 = vmatmul.bf16.gmra.mxu0 %v584
        %v884 = vpop.f32.mrf.mxu0
        %v885 = vadd.f32 %v796, %v884
        %v886 = vpop.f32.mrf.mxu0
        %v887 = vadd.f32 %v798, %v886
        %888 = vmatmul.bf16.gmra.mxu0 %v585
        %v889 = vpop.f32.mrf.mxu0
        %v890 = vadd.f32 %v801, %v889
        %v891 = vpop.f32.mrf.mxu0
        %v892 = vadd.f32 %v803, %v891
        %893 = vmatmul.bf16.gmra.mxu0 %v586
        %v894 = vpop.f32.mrf.mxu0
        %v895 = vadd.f32 %v806, %v894
        %v896 = vpop.f32.mrf.mxu0
        %v897 = vadd.f32 %v808, %v896
        %898 = vmatmul.bf16.gmra.mxu0 %v587
        %v899 = vpop.f32.mrf.mxu0
        %v900 = vadd.f32 %v811, %v899
        %v901 = vpop.f32.mrf.mxu0
        %v902 = vadd.f32 %v813, %v901
        %903 = vmatmul.bf16.gmra.mxu0 %v588
        %v904 = vpop.f32.mrf.mxu0
        %v905 = vadd.f32 %v816, %v904
        %v906 = vpop.f32.mrf.mxu0
        %v907 = vadd.f32 %v818, %v906
        %908 = vmatmul.bf16.gmra.mxu0 %v589
        %v909 = vpop.f32.mrf.mxu0
        %v910 = vadd.f32 %v821, %v909
        %v911 = vpop.f32.mrf.mxu0
        %v912 = vadd.f32 %v823, %v911
        %913 = vdwg.mxu0
        %v914 = vld [vmem:[%s199] sm:$0xff]
        %v915 = vld [vmem:[%s199 + $0x8] sm:$0xff]
        %v916 = vld [vmem:[%s199 + $0x10] sm:$0xff]
        %v917 = vld [vmem:[%s199 + $0x18] sm:$0xff]
        %v918 = vld [vmem:[%s199 + $0x20] sm:$0xff]
        %v919 = vld [vmem:[%s199 + $0x28] sm:$0xff]
        %v920 = vld [vmem:[%s199 + $0x30] sm:$0xff]
        %v921 = vld [vmem:[%s199 + $0x38] sm:$0xff]
        %v922 = vld [vmem:[%s199 + $0x40] sm:$0xff]
        %v923 = vld [vmem:[%s199 + $0x48] sm:$0xff]
        %v924 = vld [vmem:[%s199 + $0x50] sm:$0xff]
        %v925 = vld [vmem:[%s199 + $0x58] sm:$0xff]
        %v926 = vld [vmem:[%s199 + $0x60] sm:$0xff]
        %v927 = vld [vmem:[%s199 + $0x68] sm:$0xff]
        %v928 = vld [vmem:[%s199 + $0x70] sm:$0xff]
        %v929 = vld [vmem:[%s199 + $0x78] sm:$0xff]
        %v930 = vld [vmem:[%s199 + $0x80] sm:$0xff]
        %v931 = vld [vmem:[%s199 + $0x88] sm:$0xff]
        %v932 = vld [vmem:[%s199 + $0x90] sm:$0xff]
        %v933 = vld [vmem:[%s199 + $0x98] sm:$0xff]
        %v934 = vld [vmem:[%s199 + $0xa0] sm:$0xff]
        %v935 = vld [vmem:[%s199 + $0xa8] sm:$0xff]
        %v936 = vld [vmem:[%s199 + $0xb0] sm:$0xff]
        %v937 = vld [vmem:[%s199 + $0xb8] sm:$0xff]
        %v938 = vld [vmem:[%s199 + $0xc0] sm:$0xff]
        %v939 = vld [vmem:[%s199 + $0xc8] sm:$0xff]
        %v940 = vld [vmem:[%s199 + $0xd0] sm:$0xff]
        %v941 = vld [vmem:[%s199 + $0xd8] sm:$0xff]
        %v942 = vld [vmem:[%s199 + $0xe0] sm:$0xff]
        %v943 = vld [vmem:[%s199 + $0xe8] sm:$0xff]
        %v944 = vld [vmem:[%s199 + $0xf0] sm:$0xff]
        %v945 = vld [vmem:[%s199 + $0xf8] sm:$0xff]
        %947 = vset.pattern.permute.xlu0 0
        %948 = vperm.xlu0 %947, %v914
        %v949 = vpop.permute.xlu0 %948
        %952 = vset.pattern.permute.xlu0 0
        %953 = vperm.xlu0 %952, %v915
        %v954 = vpop.permute.xlu0 %953
        %957 = vset.pattern.permute.xlu0 0
        %958 = vperm.xlu0 %957, %v916
        %v959 = vpop.permute.xlu0 %958
        %962 = vset.pattern.permute.xlu0 0
        %963 = vperm.xlu0 %962, %v917
        %v964 = vpop.permute.xlu0 %963
        %967 = vset.pattern.permute.xlu0 0
        %968 = vperm.xlu0 %967, %v918
        %v969 = vpop.permute.xlu0 %968
        %972 = vset.pattern.permute.xlu0 0
        %973 = vperm.xlu0 %972, %v919
        %v974 = vpop.permute.xlu0 %973
        %977 = vset.pattern.permute.xlu0 0
        %978 = vperm.xlu0 %977, %v920
        %v979 = vpop.permute.xlu0 %978
        %982 = vset.pattern.permute.xlu0 0
        %983 = vperm.xlu0 %982, %v921
        %v984 = vpop.permute.xlu0 %983
        %987 = vset.pattern.permute.xlu0 0
        %988 = vperm.xlu0 %987, %v922
        %v989 = vpop.permute.xlu0 %988
        %992 = vset.pattern.permute.xlu0 0
        %993 = vperm.xlu0 %992, %v923
        %v994 = vpop.permute.xlu0 %993
        %997 = vset.pattern.permute.xlu0 0
        %998 = vperm.xlu0 %997, %v924
        %v999 = vpop.permute.xlu0 %998
        %1002 = vset.pattern.permute.xlu0 0
        %1003 = vperm.xlu0 %1002, %v925
        %v1004 = vpop.permute.xlu0 %1003
        %1007 = vset.pattern.permute.xlu0 0
        %1008 = vperm.xlu0 %1007, %v926
        %v1009 = vpop.permute.xlu0 %1008
        %1012 = vset.pattern.permute.xlu0 0
        %1013 = vperm.xlu0 %1012, %v927
        %v1014 = vpop.permute.xlu0 %1013
        %1017 = vset.pattern.permute.xlu0 0
        %1018 = vperm.xlu0 %1017, %v928
        %v1019 = vpop.permute.xlu0 %1018
        %1022 = vset.pattern.permute.xlu0 0
        %1023 = vperm.xlu0 %1022, %v929
        %v1024 = vpop.permute.xlu0 %1023
        %1027 = vset.pattern.permute.xlu0 0
        %1028 = vperm.xlu0 %1027, %v930
        %v1029 = vpop.permute.xlu0 %1028
        %1032 = vset.pattern.permute.xlu0 0
        %1033 = vperm.xlu0 %1032, %v931
        %v1034 = vpop.permute.xlu0 %1033
        %1037 = vset.pattern.permute.xlu0 0
        %1038 = vperm.xlu0 %1037, %v932
        %v1039 = vpop.permute.xlu0 %1038
        %1042 = vset.pattern.permute.xlu0 0
        %1043 = vperm.xlu0 %1042, %v933
        %v1044 = vpop.permute.xlu0 %1043
        %1047 = vset.pattern.permute.xlu0 0
        %1048 = vperm.xlu0 %1047, %v934
        %v1049 = vpop.permute.xlu0 %1048
        %1052 = vset.pattern.permute.xlu0 0
        %1053 = vperm.xlu0 %1052, %v935
        %v1054 = vpop.permute.xlu0 %1053
        %1057 = vset.pattern.permute.xlu0 0
        %1058 = vperm.xlu0 %1057, %v936
        %v1059 = vpop.permute.xlu0 %1058
        %1062 = vset.pattern.permute.xlu0 0
        %1063 = vperm.xlu0 %1062, %v937
        %v1064 = vpop.permute.xlu0 %1063
        %1067 = vset.pattern.permute.xlu0 0
        %1068 = vperm.xlu0 %1067, %v938
        %v1069 = vpop.permute.xlu0 %1068
        %1072 = vset.pattern.permute.xlu0 0
        %1073 = vperm.xlu0 %1072, %v939
        %v1074 = vpop.permute.xlu0 %1073
        %1077 = vset.pattern.permute.xlu0 0
        %1078 = vperm.xlu0 %1077, %v940
        %v1079 = vpop.permute.xlu0 %1078
        %1082 = vset.pattern.permute.xlu0 0
        %1083 = vperm.xlu0 %1082, %v941
        %v1084 = vpop.permute.xlu0 %1083
        %1087 = vset.pattern.permute.xlu0 0
        %1088 = vperm.xlu0 %1087, %v942
        %v1089 = vpop.permute.xlu0 %1088
        %1092 = vset.pattern.permute.xlu0 0
        %1093 = vperm.xlu0 %1092, %v943
        %v1094 = vpop.permute.xlu0 %1093
        %1097 = vset.pattern.permute.xlu0 0
        %1098 = vperm.xlu0 %1097, %v944
        %v1099 = vpop.permute.xlu0 %1098
        %1102 = vset.pattern.permute.xlu0 0
        %1103 = vperm.xlu0 %1102, %v945
        %v1104 = vpop.permute.xlu0 %1103
        %v1106 = vmul.f32 %v616, %v949
        %v1107 = vmul.f32 %v618, %v954
        %v1108 = vmul.f32 %v621, %v959
        %v1109 = vmul.f32 %v623, %v964
        %v1110 = vmul.f32 %v626, %v969
        %v1111 = vmul.f32 %v628, %v974
        %v1112 = vmul.f32 %v631, %v979
        %v1113 = vmul.f32 %v633, %v984
        %v1114 = vmul.f32 %v636, %v989
        %v1115 = vmul.f32 %v638, %v994
        %v1116 = vmul.f32 %v641, %v999
        %v1117 = vmul.f32 %v643, %v1004
        %v1118 = vmul.f32 %v646, %v1009
        %v1119 = vmul.f32 %v648, %v1014
        %v1120 = vmul.f32 %v651, %v1019
        %v1121 = vmul.f32 %v653, %v1024
        %v1122 = vmul.f32 %v656, %v1029
        %v1123 = vmul.f32 %v658, %v1034
        %v1124 = vmul.f32 %v661, %v1039
        %v1125 = vmul.f32 %v663, %v1044
        %v1126 = vmul.f32 %v666, %v1049
        %v1127 = vmul.f32 %v668, %v1054
        %v1128 = vmul.f32 %v671, %v1059
        %v1129 = vmul.f32 %v673, %v1064
        %v1130 = vmul.f32 %v676, %v1069
        %v1131 = vmul.f32 %v678, %v1074
        %v1132 = vmul.f32 %v681, %v1079
        %v1133 = vmul.f32 %v683, %v1084
        %v1134 = vmul.f32 %v686, %v1089
        %v1135 = vmul.f32 %v688, %v1094
        %v1136 = vmul.f32 %v691, %v1099
        %v1137 = vmul.f32 %v693, %v1104
        %v1138 = vmul.f32 %v1106, %v835
        %v1139 = vmul.f32 %v1107, %v837
        %v1140 = vmul.f32 %v1108, %v840
        %v1141 = vmul.f32 %v1109, %v842
        %v1142 = vmul.f32 %v1110, %v845
        %v1143 = vmul.f32 %v1111, %v847
        %v1144 = vmul.f32 %v1112, %v850
        %v1145 = vmul.f32 %v1113, %v852
        %v1146 = vmul.f32 %v1114, %v855
        %v1147 = vmul.f32 %v1115, %v857
        %v1148 = vmul.f32 %v1116, %v860
        %v1149 = vmul.f32 %v1117, %v862
        %v1150 = vmul.f32 %v1118, %v865
        %v1151 = vmul.f32 %v1119, %v867
        %v1152 = vmul.f32 %v1120, %v870
        %v1153 = vmul.f32 %v1121, %v872
        %v1154 = vmul.f32 %v1122, %v875
        %v1155 = vmul.f32 %v1123, %v877
        %v1156 = vmul.f32 %v1124, %v880
        %v1157 = vmul.f32 %v1125, %v882
        %v1158 = vmul.f32 %v1126, %v885
        %v1159 = vmul.f32 %v1127, %v887
        %v1160 = vmul.f32 %v1128, %v890
        %v1161 = vmul.f32 %v1129, %v892
        %v1162 = vmul.f32 %v1130, %v895
        %v1163 = vmul.f32 %v1131, %v897
        %v1164 = vmul.f32 %v1132, %v900
        %v1165 = vmul.f32 %v1133, %v902
        %v1166 = vmul.f32 %v1134, %v905
        %v1167 = vmul.f32 %v1135, %v907
        %v1168 = vmul.f32 %v1136, %v910
        %v1169 = vmul.f32 %v1137, %v912
        %v1170 = vadd.f32 %v1138, %v1139
        %v1171 = vadd.f32 %v1170, %v1140
        %v1172 = vadd.f32 %v1171, %v1141
        %v1173 = vadd.f32 %v1172, %v1142
        %v1174 = vadd.f32 %v1173, %v1143
        %v1175 = vadd.f32 %v1174, %v1144
        %v1176 = vadd.f32 %v1175, %v1145
        %v1177 = vadd.f32 %v1176, %v1146
        %v1178 = vadd.f32 %v1177, %v1147
        %v1179 = vadd.f32 %v1178, %v1148
        %v1180 = vadd.f32 %v1179, %v1149
        %v1181 = vadd.f32 %v1180, %v1150
        %v1182 = vadd.f32 %v1181, %v1151
        %v1183 = vadd.f32 %v1182, %v1152
        %v1184 = vadd.f32 %v1183, %v1153
        %v1185 = vadd.f32 %v1184, %v1154
        %v1186 = vadd.f32 %v1185, %v1155
        %v1187 = vadd.f32 %v1186, %v1156
        %v1188 = vadd.f32 %v1187, %v1157
        %v1189 = vadd.f32 %v1188, %v1158
        %v1190 = vadd.f32 %v1189, %v1159
        %v1191 = vadd.f32 %v1190, %v1160
        %v1192 = vadd.f32 %v1191, %v1161
        %v1193 = vadd.f32 %v1192, %v1162
        %v1194 = vadd.f32 %v1193, %v1163
        %v1195 = vadd.f32 %v1194, %v1164
        %v1196 = vadd.f32 %v1195, %v1165
        %v1197 = vadd.f32 %v1196, %v1166
        %v1198 = vadd.f32 %v1197, %v1167
        %v1199 = vadd.f32 %v1198, %v1168
        %v1200 = vadd.f32 %v1199, %v1169
        %v1201 = vrot.slane %v1200, 4
        %v1202 = vadd.f32 %v1200, %v1201
        %v1203 = vrot.slane %v1202, 2
        %v1204 = vadd.f32 %v1202, %v1203
        %v1205 = vrot.slane %v1204, 1
        %v1206 = vadd.f32 %v1204, %v1205
        %1207 = vst [vmem:[%s189] sm:$0x1] %v1206
        %s1208 = sand.u32 %s109, 1
        %s1209 = scalar_lea.sflag [#allocation5], %s1208
        %s1210 = sand.u32 %s109, 1
        %s1211 = scalar_lea.vmem [#allocation4], %s1210
        // Predicated region
        $region33: #{tpu_custom_call.1} parent=31 // pred_check
          %p1212 = pneg %p119
        $region34: #{tpu_custom_call.1} parent=31 // pred_check_branch
          %1214 = sbr.rel (%p1212) target = $region36
        $region35: #{tpu_custom_call.1} parent=31 // pred_region
          %1216 = vsyncadd %s1209, 0
          %s1217 = scalar_lea.hbm %s4, %s26
          %s1219 = sshll.u32 %s1211, 4
          %s1220 = int_to_ptr.vmem [resolvable:$true] %s1219
          %s1221 = sshll.u32 %s1217, 4
          %s1222 = int_to_ptr.hbm [resolvable:$true] %s1221
          %1224 = dma.vmem_to_hbm [thread:$0]  %s1220, 16, %s1222, %s1209
        $region36: #{tpu_custom_call.1} parent=31 // pred_fallthru
          _
      $region32: #{tpu_custom_call.1} parent=5 // pred_fallthru
        _
      %p1225 = scmp.le.s32.totalorder 2, %s21
      // Predicated region
      $region37: #{tpu_custom_call.1} parent=5 // pred_check
        %p1226 = pneg %p1225
      $region38: #{tpu_custom_call.1} parent=5 // pred_check_branch
        %1228 = sbr.rel (%p1226) target = $region40
      $region39: #{tpu_custom_call.1} parent=5 // pred_region
        %s1229 = ssub.s32 %s21, 2
        // Predicated region
        $region41: #{tpu_custom_call.1} parent=39 // pred_check
          %p1230 = pneg %p125
        $region42: #{tpu_custom_call.1} parent=39 // pred_check_branch
          %1232 = sbr.rel (%p1230) target = $region44
        $region43: #{tpu_custom_call.1} parent=39 // pred_region
          %s1233 = sand.u32 %s110, 1
          %s1234 = scalar_lea.sflag [#allocation5], %s1233
          %s1235 = sand.u32 %s110, 1
          %s1236 = scalar_lea.vmem [#allocation4], %s1235
          %1238 = dma.done %s1234, 16
        $region44: #{tpu_custom_call.1} parent=39 // pred_fallthru
          _
      $region40: #{tpu_custom_call.1} parent=5 // pred_fallthru
        _
    $region6: #{tpu_custom_call.1} parent=1 // loop_footer
      %s25 = sadd.s32 1, %s21
    $region7: #{tpu_custom_call.1} parent=1 // loop_footer_branch
      %20 = sbr.rel target = $region3
    $region8: #{tpu_custom_call.1} parent=1 // loop_exit
      _
    %1239 = vsyncpa [#allocation5], 1
    %s1240 = scalar_lea.sflag [#allocation5], 1
    %1241 = vsyncpa %s1240, 1

</llo_original>
